<compile_context>
chip_gen: v7x
topology: tpu7x:2x2x1
jax: 0.10.0
libtpu: 0.0.40
codegen_flags: <defaults>
</compile_context>

<pallas_src>
import numpy as np
import jax
import jax.numpy as jnp
from jax import lax
from jax.experimental import pallas as pl
from jax.experimental.pallas import tpu as pltpu

NEG_INF = -9999999999.0   # matches `inf = 9999999999` in the PyTorch module
EPS = 1e-8                # F.cosine_similarity eps
EPS2 = EPS * EPS


def _round_up(x, m):
    return ((x + m - 1) // m) * m


# ----------------------------------------------------------------------------
# Fused kernel: support statistics (step 0) + tiled soft-label refinement.
# ----------------------------------------------------------------------------
def _prototype_kernel(scal_ref, nun_ref, sup_ref, pr_ref, hop2_ref, un_ref,
                      out_ref,
                      pt_sc, ipt_sc, thr_sc, ptn2_sc, acc_emb, acc_sum):
    i = pl.program_id(0)
    tile = un_ref.shape[0]

    # ---- step 0: loop-invariant support statistics -> VMEM scratch ---------
    @pl.when(i == 0)
    def _():
        sup = sup_ref[...]                                   # (n_way,k_shot,D)
        pr = pr_ref[...]                                     # (n_way,k_shot)
        hop2 = hop2_ref[...]                                 # (n_way,k_shot)

        pr_scores = pr / jnp.sum(pr, axis=1, keepdims=True)
        hop2_scores = hop2 / jnp.sum(hop2, axis=1, keepdims=True)
        scores = 0.5 * (hop2_scores + pr_scores)             # (n_way,k_shot)
        # NOTE: sigmoid(log(degree)) "hop1" scores in the original are never
        # used in the returned value -> intentionally omitted.

        ipt_sc[...] = jnp.sum(sup * scores[..., None], axis=1)   # (n_way,D)

        init_pt = jnp.mean(sup, axis=1)                          # (n_way,D)
        pt_sc[...] = init_pt
        pt_n2 = jnp.sum(init_pt * init_pt, axis=-1)              # (n_way,)
        ptn2_sc[...] = pt_n2[None, :]                            # (1,n_way)

        # threshold = mean cosine(support, init_pt), pre-scaled by w_thres
        dots_sp = jnp.sum(sup * init_pt[:, None, :], axis=-1)    # (n_way,k_shot)
        sup_n2 = jnp.sum(sup * sup, axis=-1)                     # (n_way,k_shot)
        cos_sp = dots_sp * lax.rsqrt(
            jnp.maximum(sup_n2 * pt_n2[:, None], EPS2))
        w_thres = scal_ref[0, 1]
        thr_sc[...] = (w_thres * jnp.mean(cos_sp, axis=1))[None, :]  # (1,n_way)

        acc_emb[...] = jnp.zeros_like(acc_emb)
        acc_sum[...] = jnp.zeros_like(acc_sum)

    # ---- per-tile: cosine -> masked softmax -> accumulate ------------------
    n_un = nun_ref[0, 0]
    row = i * tile + lax.broadcasted_iota(jnp.int32, (tile, 1), 0)
    valid = row < n_un                                           # (tile,1) bool
    # zero the padded rows of the ragged last tile before any arithmetic
    un = jnp.where(valid, un_ref[...], 0.0)                      # (tile,D)

    pt = pt_sc[...]                                              # (n_way,D)
    un_n2 = jnp.sum(un * un, axis=-1, keepdims=True)             # (tile,1)
    dots = lax.dot_general(un, pt, (((1,), (1,)), ((), ())),
                           preferred_element_type=jnp.float32)   # (tile,n_way)
    cos = dots * lax.rsqrt(jnp.maximum(un_n2 * ptn2_sc[...], EPS2))

    thr_eff = thr_sc[...]                                        # (1,n_way)
    below = cos < thr_eff
    slab = jnp.where(below, NEG_INF, cos - thr_eff)
    m = jnp.max(slab, axis=-1, keepdims=True)
    e = jnp.exp(slab - m)
    p = e / jnp.sum(e, axis=-1, keepdims=True)
    # Rows with every class below threshold collapse to the uniform 1/n_way
    # distribution; the original zeros them via an exact `p == 1/n_way`
    # float equality.  Detect those rows explicitly (robust to any change in
    # the softmax arithmetic) and also drop the padded rows of the last tile.
    drop = jnp.logical_or(jnp.all(below, axis=-1, keepdims=True),
                          jnp.logical_not(valid))
    p = jnp.where(drop, 0.0, p)

    acc_emb[...] += lax.dot_general(p, un, (((0,), (0,)), ((), ())),
                                    preferred_element_type=jnp.float32)
    acc_sum[...] += jnp.sum(p, axis=0, keepdims=True)            # (1,n_way)

    # ---- last step: normalise and write the refined prototypes -------------
    @pl.when(i == pl.num_programs(0) - 1)
    def _():
        w_pt = scal_ref[0, 0]
        denom = 1.0 + w_pt * acc_sum[...]                        # (1,n_way)
        out_ref[...] = ((ipt_sc[...] + w_pt * acc_emb[...]) / denom.T
                        ).astype(out_ref.dtype)


def _choose_tile(n_un, d, max_tile):
    tile = max(8, min(int(max_tile), _round_up(int(n_un), 8)))
    # v7x has 64 MiB VMEM (32 MiB default scoped) vs 128 MiB on v5e/v6e; keep
    # the double-buffered un_emb stream well under budget for any D.
    while tile > 64 and 2 * tile * d * 4 > (16 << 20):
        tile //= 2
    return _round_up(tile, 8)


def prototype_refine(support, pr_sup, hop2_sup, un_emb, w_pt, w_thres,
                     max_tile=512):
    """Single fused pallas_call: support stats + soft-label + refinement."""
    support = support.astype(jnp.float32)
    pr_sup = pr_sup.astype(jnp.float32)
    hop2_sup = hop2_sup.astype(jnp.float32)
    un_emb = un_emb.astype(jnp.float32)

    n_way, k_shot, d = support.shape
    n_un = un_emb.shape[0]
    tile = _choose_tile(n_un, d, max_tile)
    num_tiles = int(pl.cdiv(n_un, tile))

    scal = jnp.array([[w_pt, w_thres]], jnp.float32)
    nun = jnp.array([[n_un]], jnp.int32)
    smem = pl.BlockSpec(memory_space=pltpu.MemorySpace.SMEM)

    return pl.pallas_call(
        _prototype_kernel,
        out_shape=jax.ShapeDtypeStruct((n_way, d), jnp.float32),
        grid=(num_tiles,),
        in_specs=[
            smem,                                                 # [w_pt, w_thres]
            smem,                                                 # n_un
            pl.BlockSpec((n_way, k_shot, d), lambda i: (0, 0, 0)),  # support
            pl.BlockSpec((n_way, k_shot), lambda i: (0, 0)),        # pagerank
            pl.BlockSpec((n_way, k_shot), lambda i: (0, 0)),        # 2-hop count
            pl.BlockSpec((tile, d), lambda i: (i, 0)),              # node tile
        ],
        out_specs=pl.BlockSpec((n_way, d), lambda i: (0, 0)),
        scratch_shapes=[
            pltpu.VMEM((n_way, d), jnp.float32),   # init_pt
            pltpu.VMEM((n_way, d), jnp.float32),   # ipt_pt
            pltpu.VMEM((1, n_way), jnp.float32),   # w_thres * threshold
            pltpu.VMEM((1, n_way), jnp.float32),   # ||init_pt||^2
            pltpu.VMEM((n_way, d), jnp.float32),   # acc: slabel^T @ un
            pltpu.VMEM((1, n_way), jnp.float32),   # acc: sum(slabel, 0)
        ],
        compiler_params=pltpu.CompilerParams(
            dimension_semantics=("arbitrary",)),
    )(scal, nun, support, pr_sup, hop2_sup, un_emb)


# ----------------------------------------------------------------------------
# Graph preprocessing glue (replaces networkx pagerank / 2-hop counting).
# ----------------------------------------------------------------------------
def build_adj(edge_index, num_nodes):
    adj = [set() for _ in range(num_nodes)]
    for u, v in zip(edge_index[0], edge_index[1]):
        u, v = int(u), int(v)
        adj[u].add(v)
        adj[v].add(u)
    return adj


def pagerank_np(adj, alpha=0.85, tol=1e-6, max_iter=100):
    n = len(adj)
    deg = np.array([len(a) for a in adj], dtype=np.float64)
    pr = np.full(n, 1.0 / n)
    for _ in range(max_iter):
        new = np.full(n, (1.0 - alpha) / n)
        for u in range(n):
            if deg[u] > 0:
                share = alpha * pr[u] / deg[u]
                for v in adj[u]:
                    new[v] += share
            else:
                new += alpha * pr[u] / n
        if np.abs(new - pr).sum() < n * tol:
            pr = new
            break
        pr = new
    return pr


def hop2_counts_np(adj):
    n = len(adj)
    out = np.zeros(n, dtype=np.float64)
    for u in range(n):
        s = set()
        for v in adj[u]:
            s |= adj[v]
        out[u] = len(s)
    return out


# ----------------------------------------------------------------------------
# Full forward (Pallas kernel + glue).
# ----------------------------------------------------------------------------
def prototype_forward(embeddings, support_embeddings, id_support, degrees,
                      pr_sup, hop2_sup, w_pt, w_thres, n_way, k_shot,
                      max_tile=512):
    del degrees, n_way, k_shot  # degrees only feeds the dead "hop1" path
    n_total = embeddings.shape[0]
    id_unlabelled = np.delete(np.arange(n_total), np.asarray(id_support))
    # TODO(synk): gather the unlabelled rows inside the kernel via a
    # scalar-prefetch index table instead of this XLA gather (saves one full
    # HBM copy of the unlabelled embeddings).
    un_emb = jnp.asarray(embeddings)[jnp.asarray(id_unlabelled)]
    return prototype_refine(support_embeddings, pr_sup, hop2_sup, un_emb,
                            w_pt, w_thres, max_tile=max_tile)


# ----------------------------------------------------------------------------
# Pure NumPy reference for verification (mirrors the module's forward).
# ----------------------------------------------------------------------------
def reference_forward(embeddings, support, id_support, pr_sup, hop2_sup,
                      w_pt, w_thres):
    emb = np.asarray(embeddings, np.float32)
    sup = np.asarray(support, np.float32)
    prn = (pr_sup / pr_sup.sum(1, keepdims=True)).astype(np.float32)
    h2n = (hop2_sup / hop2_sup.sum(1, keepdims=True)).astype(np.float32)
    scores = 0.5 * (prn + h2n)
    ipt_pt = (sup * scores[..., None]).sum(1)
    init_pt = sup.mean(1)

    pt_n2 = (init_pt * init_pt).sum(-1)
    sup_n2 = (sup * sup).sum(-1)
    dots_sp = (sup * init_pt[:, None, :]).sum(-1)
    cos_sp = dots_sp / np.sqrt(np.maximum(sup_n2 * pt_n2[:, None], EPS2))
    thr = cos_sp.mean(1)

    id_un = np.delete(np.arange(emb.shape[0]), np.asarray(id_support))
    un = emb[id_un]
    un_n2 = (un * un).sum(-1, keepdims=True)
    cos = (un @ init_pt.T) / np.sqrt(np.maximum(un_n2 * pt_n2[None, :], EPS2))

    te = np.float32(w_thres) * thr[None, :]
    below = cos < te
    slab = np.where(below, np.float32(NEG_INF), cos - te).astype(np.float32)
    m = slab.max(1, keepdims=True)
    e = np.exp(slab - m)
    p = (e / e.sum(1, keepdims=True)).astype(np.float32)
    # original zeroing of uniform (== fully-thresholded) rows
    p = np.where(below.all(1, keepdims=True), np.float32(0.0), p)

    unemb_pt = p.T @ un
    refined = (ipt_pt + w_pt * unemb_pt) / (1.0 + w_pt * p.sum(0))[:, None]
    return refined.astype(np.float32)


if __name__ == "__main__":
    n_way, k_shot, hid_dim = 5, 5, 32
    n_nodes = 200
    w_pt_init, w_thres_init = 0.5, 0.5

    key = jax.random.PRNGKey(0)
    embeddings = jax.random.normal(key, (n_nodes, hid_dim), dtype=jnp.float32)

    # deterministic graph: ring + skip-5 edges -> every node has degree 4
    src = np.concatenate([np.arange(n_nodes), np.arange(n_nodes)])
    dst = np.concatenate([(np.arange(n_nodes) + 1) % n_nodes,
                          (np.arange(n_nodes) + 5) % n_nodes])
    edge_index = np.stack([src, dst])

    adj = build_adj(edge_index, n_nodes)
    degrees = np.array([len(a) for a in adj], dtype=np.float32)
    pr = pagerank_np(adj)
    hop2 = hop2_counts_np(adj)

    id_support = np.arange(0, 2 * n_way * k_shot, 2)  # 25 distinct support ids
    support_embeddings = np.asarray(embeddings)[id_support].reshape(
        n_way, k_shot, hid_dim)
    pr_sup = pr[id_support].reshape(n_way, k_shot).astype(np.float32)
    hop2_sup = hop2[id_support].reshape(n_way, k_shot).astype(np.float32)

    ref = reference_forward(np.asarray(embeddings), support_embeddings,
                            id_support, pr_sup, hop2_sup,
                            w_pt_init, w_thres_init)

    # 1) default large-tile path (whole unlabelled set fits in one tile here)
    refined = prototype_forward(
        embeddings, jnp.asarray(support_embeddings), id_support,
        jnp.asarray(degrees), jnp.asarray(pr_sup), jnp.asarray(hop2_sup),
        w_pt_init, w_thres_init, n_way, k_shot)
    refined = jax.block_until_ready(refined)

    # mirror the module's asserts
    assert not bool(jnp.any(jnp.isnan(refined)))
    assert not bool(jnp.any(jnp.isinf(refined)))
    np.testing.assert_allclose(np.asarray(refined), ref, rtol=2e-4, atol=2e-4)

    # 2) force small tiles to exercise the multi-step grid accumulation and
    #    the masked ragged last tile (175 unlabelled rows -> 3 tiles of 64)
    refined_mt = prototype_forward(
        embeddings, jnp.asarray(support_embeddings), id_support,
        jnp.asarray(degrees), jnp.asarray(pr_sup), jnp.asarray(hop2_sup),
        w_pt_init, w_thres_init, n_way, k_shot, max_tile=64)
    refined_mt = jax.block_until_ready(refined_mt)
    np.testing.assert_allclose(np.asarray(refined_mt), ref, rtol=2e-4, atol=2e-4)

    print("KERNEL_OK")
</pallas_src>

<mosaic_0001>
module attributes {stable_mosaic.version = 11 : i64} {
  func.func @_prototype_kernel(%arg0: i32, %arg1: memref<1x2xf32, #tpu.memory_space<smem>>, %arg2: memref<1x1xi32, #tpu.memory_space<smem>>, %arg3: memref<5x5x32xf32, #tpu.memory_space<vmem>>, %arg4: memref<5x5xf32, #tpu.memory_space<vmem>>, %arg5: memref<5x5xf32, #tpu.memory_space<vmem>>, %arg6: memref<176x32xf32, #tpu.memory_space<vmem>>, %arg7: memref<5x32xf32, #tpu.memory_space<vmem>>, %arg8: memref<5x32xf32, #tpu.memory_space<vmem>>, %arg9: memref<5x32xf32, #tpu.memory_space<vmem>>, %arg10: memref<1x5xf32, #tpu.memory_space<vmem>>, %arg11: memref<1x5xf32, #tpu.memory_space<vmem>>, %arg12: memref<5x32xf32, #tpu.memory_space<vmem>>, %arg13: memref<1x5xf32, #tpu.memory_space<vmem>>) attributes {dimension_semantics = [#tpu.dimension_semantics<arbitrary>], iteration_bounds = array<i64: 1>, scalar_prefetch = 0 : i64, scratch_operands = 6 : i64, tpu.core_type = #tpu.core_type<tc>, window_params = [{transform_indices = @transform_0, window_bounds = array<i64: 1, 2>}, {transform_indices = @transform_1, window_bounds = array<i64: 1, 1>}, {pipeline_mode = #tpu.pipeline_mode<synchronous>, transform_indices = @transform_2, window_bounds = array<i64: 5, 5, 32>}, {pipeline_mode = #tpu.pipeline_mode<synchronous>, transform_indices = @transform_3, window_bounds = array<i64: 5, 5>}, {pipeline_mode = #tpu.pipeline_mode<synchronous>, transform_indices = @transform_4, window_bounds = array<i64: 5, 5>}, {transform_indices = @transform_5, window_bounds = array<i64: 176, 32>}, {pipeline_mode = #tpu.pipeline_mode<synchronous>, transform_indices = @transform_6, window_bounds = array<i64: 5, 32>}]} {
    %c0_i32 = arith.constant 0 : i32
    %0 = arith.cmpi eq, %arg0, %c0_i32 : i32
    %1 = arith.extui %0 : i1 to i32
    %c0_i32_0 = arith.constant 0 : i32
    %2 = arith.cmpi ne, %1, %c0_i32_0 : i32
    scf.if %2 {
      %c0_34 = arith.constant 0 : index
      %c0_35 = arith.constant 0 : index
      %c0_36 = arith.constant 0 : index
      %69 = vector.load %arg3[%c0_34, %c0_35, %c0_36] : memref<5x5x32xf32, #tpu.memory_space<vmem>>, vector<5x5x32xf32>
      %c0_37 = arith.constant 0 : index
      %c0_38 = arith.constant 0 : index
      %70 = vector.load %arg4[%c0_37, %c0_38] : memref<5x5xf32, #tpu.memory_space<vmem>>, vector<5x5xf32>
      %c0_39 = arith.constant 0 : index
      %c0_40 = arith.constant 0 : index
      %71 = vector.load %arg5[%c0_39, %c0_40] : memref<5x5xf32, #tpu.memory_space<vmem>>, vector<5x5xf32>
      %cst_41 = arith.constant dense<0.000000e+00> : vector<5xf32>
      %72 = vector.multi_reduction <add>, %70, %cst_41 [1] : vector<5x5xf32> to vector<5xf32>
      %73 = vector.shape_cast %72 : vector<5xf32> to vector<5x1xf32>
      %74 = vector.broadcast %73 : vector<5x1xf32> to vector<5x5xf32>
      %75 = arith.divf %70, %74 : vector<5x5xf32>
      %cst_42 = arith.constant dense<0.000000e+00> : vector<5xf32>
      %76 = vector.multi_reduction <add>, %71, %cst_42 [1] : vector<5x5xf32> to vector<5xf32>
      %77 = vector.shape_cast %76 : vector<5xf32> to vector<5x1xf32>
      %78 = vector.broadcast %77 : vector<5x1xf32> to vector<5x5xf32>
      %79 = arith.divf %71, %78 : vector<5x5xf32>
      %80 = arith.addf %79, %75 : vector<5x5xf32>
      %cst_43 = arith.constant 5.000000e-01 : f32
      %81 = vector.broadcast %cst_43 : f32 to vector<5x5xf32>
      %82 = arith.mulf %81, %80 : vector<5x5xf32>
      %83 = vector.shape_cast %82 : vector<5x5xf32> to vector<5x5x1xf32>
      %84 = vector.broadcast %83 : vector<5x5x1xf32> to vector<5x5x32xf32>
      %85 = arith.mulf %69, %84 : vector<5x5x32xf32>
      %cst_44 = arith.constant dense<0.000000e+00> : vector<5x32xf32>
      %86 = vector.multi_reduction <add>, %85, %cst_44 [1] : vector<5x5x32xf32> to vector<5x32xf32>
      %c0_45 = arith.constant 0 : index
      %c0_46 = arith.constant 0 : index
      %87 = vector.load %arg9[%c0_45, %c0_46] : memref<5x32xf32, #tpu.memory_space<vmem>>, vector<5x32xf32>
      tpu.vector_store %arg9[%c0_45, %c0_46], %86 {strides = array<i32>} : memref<5x32xf32, #tpu.memory_space<vmem>>, vector<5x32xf32>,
      %cst_47 = arith.constant dense<0.000000e+00> : vector<5x32xf32>
      %88 = vector.multi_reduction <add>, %69, %cst_47 [1] : vector<5x5x32xf32> to vector<5x32xf32>
      %cst_48 = arith.constant 5.000000e+00 : f32
      %89 = vector.broadcast %cst_48 : f32 to vector<5x32xf32>
      %90 = arith.divf %88, %89 : vector<5x32xf32>
      %c0_49 = arith.constant 0 : index
      %c0_50 = arith.constant 0 : index
      %91 = vector.load %arg8[%c0_49, %c0_50] : memref<5x32xf32, #tpu.memory_space<vmem>>, vector<5x32xf32>
      tpu.vector_store %arg8[%c0_49, %c0_50], %90 {strides = array<i32>} : memref<5x32xf32, #tpu.memory_space<vmem>>, vector<5x32xf32>,
      %92 = arith.mulf %90, %90 : vector<5x32xf32>
      %cst_51 = arith.constant dense<0.000000e+00> : vector<5xf32>
      %93 = vector.multi_reduction <add>, %92, %cst_51 [1] : vector<5x32xf32> to vector<5xf32>
      %94 = vector.shape_cast %93 : vector<5xf32> to vector<1x5xf32>
      %c0_52 = arith.constant 0 : index
      %c0_53 = arith.constant 0 : index
      %95 = vector.load %arg11[%c0_52, %c0_53] : memref<1x5xf32, #tpu.memory_space<vmem>>, vector<1x5xf32>
      tpu.vector_store %arg11[%c0_52, %c0_53], %94 {strides = array<i32>} : memref<1x5xf32, #tpu.memory_space<vmem>>, vector<1x5xf32>,
      %96 = vector.shape_cast %90 : vector<5x32xf32> to vector<5x1x32xf32>
      %97 = vector.broadcast %96 : vector<5x1x32xf32> to vector<5x5x32xf32>
      %98 = arith.mulf %69, %97 : vector<5x5x32xf32>
      %cst_54 = arith.constant dense<0.000000e+00> : vector<5x5xf32>
      %99 = vector.multi_reduction <add>, %98, %cst_54 [2] : vector<5x5x32xf32> to vector<5x5xf32>
      %100 = arith.mulf %69, %69 : vector<5x5x32xf32>
      %cst_55 = arith.constant dense<0.000000e+00> : vector<5x5xf32>
      %101 = vector.multi_reduction <add>, %100, %cst_55 [2] : vector<5x5x32xf32> to vector<5x5xf32>
      %102 = vector.shape_cast %93 : vector<5xf32> to vector<5x1xf32>
      %103 = vector.broadcast %102 : vector<5x1xf32> to vector<5x5xf32>
      %104 = arith.mulf %101, %103 : vector<5x5xf32>
      %cst_56 = arith.constant 1.000000e-16 : f32
      %105 = vector.broadcast %cst_56 : f32 to vector<5x5xf32>
      %106 = arith.maximumf %104, %105 : vector<5x5xf32>
      %107 = math.rsqrt %106 : vector<5x5xf32>
      %108 = arith.mulf %99, %107 : vector<5x5xf32>
      %c0_57 = arith.constant 0 : index
      %c1 = arith.constant 1 : index
      %109 = memref.load %arg1[%c0_57, %c1] : memref<1x2xf32, #tpu.memory_space<smem>>
      %cst_58 = arith.constant dense<0.000000e+00> : vector<5xf32>
      %110 = vector.multi_reduction <add>, %108, %cst_58 [1] : vector<5x5xf32> to vector<5xf32>
      %cst_59 = arith.constant 5.000000e+00 : f32
      %111 = vector.broadcast %cst_59 : f32 to vector<5xf32>
      %112 = arith.divf %110, %111 : vector<5xf32>
      %113 = vector.broadcast %109 : f32 to vector<5xf32>
      %114 = arith.mulf %113, %112 : vector<5xf32>
      %115 = vector.shape_cast %114 : vector<5xf32> to vector<1x5xf32>
      %c0_60 = arith.constant 0 : index
      %c0_61 = arith.constant 0 : index
      %116 = vector.load %arg10[%c0_60, %c0_61] : memref<1x5xf32, #tpu.memory_space<vmem>>, vector<1x5xf32>
      tpu.vector_store %arg10[%c0_60, %c0_61], %115 {strides = array<i32>} : memref<1x5xf32, #tpu.memory_space<vmem>>, vector<1x5xf32>,
      %cst_62 = arith.constant 0.000000e+00 : f32
      %117 = vector.broadcast %cst_62 : f32 to vector<5x32xf32>
      %c0_63 = arith.constant 0 : index
      %c0_64 = arith.constant 0 : index
      %118 = vector.load %arg12[%c0_63, %c0_64] : memref<5x32xf32, #tpu.memory_space<vmem>>, vector<5x32xf32>
      tpu.vector_store %arg12[%c0_63, %c0_64], %117 {strides = array<i32>} : memref<5x32xf32, #tpu.memory_space<vmem>>, vector<5x32xf32>,
      %cst_65 = arith.constant 0.000000e+00 : f32
      %119 = vector.broadcast %cst_65 : f32 to vector<1x5xf32>
      %c0_66 = arith.constant 0 : index
      %c0_67 = arith.constant 0 : index
      %120 = vector.load %arg13[%c0_66, %c0_67] : memref<1x5xf32, #tpu.memory_space<vmem>>, vector<1x5xf32>
      tpu.vector_store %arg13[%c0_66, %c0_67], %119 {strides = array<i32>} : memref<1x5xf32, #tpu.memory_space<vmem>>, vector<1x5xf32>,
    } else {
    }
    %c0 = arith.constant 0 : index
    %c0_1 = arith.constant 0 : index
    %3 = memref.load %arg2[%c0, %c0_1] : memref<1x1xi32, #tpu.memory_space<smem>>
    %c176_i32 = arith.constant 176 : i32
    %4 = arith.muli %arg0, %c176_i32 : i32
    %5 = tpu.iota {dimensions = array<i32: 0>} : vector<176x1xi32>
    %6 = vector.broadcast %4 : i32 to vector<176x1xi32>
    %7 = arith.addi %6, %5 : vector<176x1xi32>
    %8 = vector.broadcast %3 : i32 to vector<176x1xi32>
    %9 = arith.cmpi slt, %7, %8 : vector<176x1xi32>
    %c0_2 = arith.constant 0 : index
    %c0_3 = arith.constant 0 : index
    %10 = vector.load %arg6[%c0_2, %c0_3] : memref<176x32xf32, #tpu.memory_space<vmem>>, vector<176x32xf32>
    %cst = arith.constant 0.000000e+00 : f32
    %11 = vector.shape_cast %9 : vector<176x1xi1> to vector<176x1xi1>
    %12 = vector.broadcast %11 : vector<176x1xi1> to vector<176x32xi1>
    %13 = vector.broadcast %cst : f32 to vector<176x32xf32>
    %14 = arith.select %12, %10, %13 : vector<176x32xi1>, vector<176x32xf32>
    %c0_4 = arith.constant 0 : index
    %c0_5 = arith.constant 0 : index
    %15 = vector.load %arg8[%c0_4, %c0_5] : memref<5x32xf32, #tpu.memory_space<vmem>>, vector<5x32xf32>
    %16 = arith.mulf %14, %14 : vector<176x32xf32>
    %cst_6 = arith.constant dense<0.000000e+00> : vector<176xf32>
    %17 = vector.multi_reduction <add>, %16, %cst_6 [1] : vector<176x32xf32> to vector<176xf32>
    %18 = vector.shape_cast %17 : vector<176xf32> to vector<176x1xf32>
    %cst_7 = arith.constant dense<0.000000e+00> : vector<176x5xf32>
    %19 = tpu.matmul %14, %15, %cst_7 {dimension_numbers = #tpu.dot_dimension_numbers<[1], [1], [0], [0], [0, 0, 1, 0], [], []>} : vector<176x32xf32>, vector<5x32xf32>, vector<176x5xf32> -> vector<176x5xf32>
    %c0_8 = arith.constant 0 : index
    %c0_9 = arith.constant 0 : index
    %20 = vector.load %arg11[%c0_8, %c0_9] : memref<1x5xf32, #tpu.memory_space<vmem>>, vector<1x5xf32>
    %21 = vector.broadcast %18 : vector<176x1xf32> to vector<176x5xf32>
    %22 = vector.broadcast %20 : vector<1x5xf32> to vector<176x5xf32>
    %23 = arith.mulf %21, %22 : vector<176x5xf32>
    %cst_10 = arith.constant 1.000000e-16 : f32
    %24 = vector.broadcast %cst_10 : f32 to vector<176x5xf32>
    %25 = arith.maximumf %23, %24 : vector<176x5xf32>
    %26 = math.rsqrt %25 : vector<176x5xf32>
    %27 = arith.mulf %19, %26 : vector<176x5xf32>
    %c0_11 = arith.constant 0 : index
    %c0_12 = arith.constant 0 : index
    %28 = vector.load %arg10[%c0_11, %c0_12] : memref<1x5xf32, #tpu.memory_space<vmem>>, vector<1x5xf32>
    %29 = vector.broadcast %28 : vector<1x5xf32> to vector<176x5xf32>
    %30 = arith.cmpf olt, %27, %29 : vector<176x5xf32>
    %31 = vector.broadcast %28 : vector<1x5xf32> to vector<176x5xf32>
    %32 = arith.subf %27, %31 : vector<176x5xf32>
    %cst_13 = arith.constant -1.000000e+10 : f32
    %33 = vector.broadcast %cst_13 : f32 to vector<176x5xf32>
    %34 = arith.select %30, %33, %32 : vector<176x5xi1>, vector<176x5xf32>
    %cst_14 = arith.constant dense<0xFF800000> : vector<176xf32>
    %35 = vector.multi_reduction <maximumf>, %34, %cst_14 [1] : vector<176x5xf32> to vector<176xf32>
    %36 = vector.shape_cast %35 : vector<176xf32> to vector<176x1xf32>
    %37 = vector.broadcast %36 : vector<176x1xf32> to vector<176x5xf32>
    %38 = arith.subf %34, %37 : vector<176x5xf32>
    %39 = math.exp %38 : vector<176x5xf32>
    %cst_15 = arith.constant dense<0.000000e+00> : vector<176xf32>
    %40 = vector.multi_reduction <add>, %39, %cst_15 [1] : vector<176x5xf32> to vector<176xf32>
    %41 = vector.shape_cast %40 : vector<176xf32> to vector<176x1xf32>
    %42 = vector.broadcast %41 : vector<176x1xf32> to vector<176x5xf32>
    %43 = arith.divf %39, %42 : vector<176x5xf32>
    %cst_16 = arith.constant 1.000000e+00 : f32
    %cst_17 = arith.constant 0.000000e+00 : f32
    %44 = vector.broadcast %cst_16 : f32 to vector<176x5xf32>
    %45 = vector.broadcast %cst_17 : f32 to vector<176x5xf32>
    %46 = arith.select %30, %44, %45 : vector<176x5xi1>, vector<176x5xf32>
    %cst_18 = arith.constant dense<0x7F800000> : vector<176xf32>
    %47 = vector.multi_reduction <minimumf>, %46, %cst_18 [1] : vector<176x5xf32> to vector<176xf32>
    %cst_19 = arith.constant 0.000000e+00 : f32
    %48 = vector.broadcast %cst_19 : f32 to vector<176xf32>
    %49 = arith.cmpf ogt, %47, %48 : vector<176xf32>
    %50 = vector.shape_cast %49 : vector<176xi1> to vector<176x1xi1>
    %cst_20 = arith.constant dense<true> : vector<176x1xi1>
    %51 = arith.xori %9, %cst_20 : vector<176x1xi1>
    %52 = arith.ori %50, %51 : vector<176x1xi1>
    %cst_21 = arith.constant 0.000000e+00 : f32
    %53 = vector.shape_cast %52 : vector<176x1xi1> to vector<176x1xi1>
    %54 = vector.broadcast %53 : vector<176x1xi1> to vector<176x5xi1>
    %55 = vector.broadcast %cst_21 : f32 to vector<176x5xf32>
    %56 = arith.select %54, %55, %43 : vector<176x5xi1>, vector<176x5xf32>
    %c0_22 = arith.constant 0 : index
    %c0_23 = arith.constant 0 : index
    %57 = vector.load %arg12[%c0_22, %c0_23] : memref<5x32xf32, #tpu.memory_space<vmem>>, vector<5x32xf32>
    %cst_24 = arith.constant dense<0.000000e+00> : vector<5x32xf32>
    %58 = tpu.matmul %56, %14, %cst_24 {dimension_numbers = #tpu.dot_dimension_numbers<[0], [0], [1], [1], [0, 1, 1, 1], [], []>} : vector<176x5xf32>, vector<176x32xf32>, vector<5x32xf32> -> vector<5x32xf32>
    %59 = arith.addf %57, %58 : vector<5x32xf32>
    %c0_25 = arith.constant 0 : index
    %c0_26 = arith.constant 0 : index
    %60 = vector.load %arg12[%c0_25, %c0_26] : memref<5x32xf32, #tpu.memory_space<vmem>>, vector<5x32xf32>
    tpu.vector_store %arg12[%c0_25, %c0_26], %59 {strides = array<i32>} : memref<5x32xf32, #tpu.memory_space<vmem>>, vector<5x32xf32>,
    %c0_27 = arith.constant 0 : index
    %c0_28 = arith.constant 0 : index
    %61 = vector.load %arg13[%c0_27, %c0_28] : memref<1x5xf32, #tpu.memory_space<vmem>>, vector<1x5xf32>
    %cst_29 = arith.constant dense<0.000000e+00> : vector<5xf32>
    %62 = vector.multi_reduction <add>, %56, %cst_29 [0] : vector<176x5xf32> to vector<5xf32>
    %63 = vector.shape_cast %62 : vector<5xf32> to vector<1x5xf32>
    %64 = arith.addf %61, %63 : vector<1x5xf32>
    %c0_30 = arith.constant 0 : index
    %c0_31 = arith.constant 0 : index
    %65 = vector.load %arg13[%c0_30, %c0_31] : memref<1x5xf32, #tpu.memory_space<vmem>>, vector<1x5xf32>
    tpu.vector_store %arg13[%c0_30, %c0_31], %64 {strides = array<i32>} : memref<1x5xf32, #tpu.memory_space<vmem>>, vector<1x5xf32>,
    %c0_i32_32 = arith.constant 0 : i32
    %66 = arith.cmpi eq, %arg0, %c0_i32_32 : i32
    %67 = arith.extui %66 : i1 to i32
    %c0_i32_33 = arith.constant 0 : i32
    %68 = arith.cmpi ne, %67, %c0_i32_33 : i32
    scf.if %68 {
      %c0_34 = arith.constant 0 : index
      %c0_35 = arith.constant 0 : index
      %69 = memref.load %arg1[%c0_34, %c0_35] : memref<1x2xf32, #tpu.memory_space<smem>>
      %c0_36 = arith.constant 0 : index
      %c0_37 = arith.constant 0 : index
      %70 = vector.load %arg13[%c0_36, %c0_37] : memref<1x5xf32, #tpu.memory_space<vmem>>, vector<1x5xf32>
      %71 = vector.broadcast %69 : f32 to vector<1x5xf32>
      %72 = arith.mulf %71, %70 : vector<1x5xf32>
      %cst_38 = arith.constant 1.000000e+00 : f32
      %73 = vector.broadcast %cst_38 : f32 to vector<1x5xf32>
      %74 = arith.addf %73, %72 : vector<1x5xf32>
      %c0_39 = arith.constant 0 : index
      %c0_40 = arith.constant 0 : index
      %75 = vector.load %arg9[%c0_39, %c0_40] : memref<5x32xf32, #tpu.memory_space<vmem>>, vector<5x32xf32>
      %c0_41 = arith.constant 0 : index
      %c0_42 = arith.constant 0 : index
      %76 = vector.load %arg12[%c0_41, %c0_42] : memref<5x32xf32, #tpu.memory_space<vmem>>, vector<5x32xf32>
      %77 = vector.broadcast %69 : f32 to vector<5x32xf32>
      %78 = arith.mulf %77, %76 : vector<5x32xf32>
      %79 = arith.addf %75, %78 : vector<5x32xf32>
      %80 = tpu.transpose %74, [1, 0] : vector<1x5xf32> -> vector<5x1xf32>
      %81 = vector.broadcast %80 : vector<5x1xf32> to vector<5x32xf32>
      %82 = arith.divf %79, %81 : vector<5x32xf32>
      %c0_43 = arith.constant 0 : index
      %c0_44 = arith.constant 0 : index
      %83 = vector.load %arg7[%c0_43, %c0_44] : memref<5x32xf32, #tpu.memory_space<vmem>>, vector<5x32xf32>
      tpu.vector_store %arg7[%c0_43, %c0_44], %82 {strides = array<i32>} : memref<5x32xf32, #tpu.memory_space<vmem>>, vector<5x32xf32>,
    } else {
    }
    return
  }
  func.func @transform_0(%arg0: i32) -> (i32, i32) {
    %c0_i32 = arith.constant 0 : i32
    %c0_i32_0 = arith.constant 0 : i32
    %c0_i32_1 = arith.constant 0 : i32
    return %c0_i32, %c0_i32_0 : i32, i32
  }
  func.func @transform_1(%arg0: i32) -> (i32, i32) {
    %c0_i32 = arith.constant 0 : i32
    %c0_i32_0 = arith.constant 0 : i32
    %c0_i32_1 = arith.constant 0 : i32
    return %c0_i32, %c0_i32_0 : i32, i32
  }
  func.func @transform_2(%arg0: i32) -> (i32, i32, i32) {
    %c0_i32 = arith.constant 0 : i32
    %c0_i32_0 = arith.constant 0 : i32
    %c0_i32_1 = arith.constant 0 : i32
    %c0_i32_2 = arith.constant 0 : i32
    return %c0_i32, %c0_i32_0, %c0_i32_1 : i32, i32, i32
  }
  func.func @transform_3(%arg0: i32) -> (i32, i32) {
    %c0_i32 = arith.constant 0 : i32
    %c0_i32_0 = arith.constant 0 : i32
    %c0_i32_1 = arith.constant 0 : i32
    return %c0_i32, %c0_i32_0 : i32, i32
  }
  func.func @transform_4(%arg0: i32) -> (i32, i32) {
    %c0_i32 = arith.constant 0 : i32
    %c0_i32_0 = arith.constant 0 : i32
    %c0_i32_1 = arith.constant 0 : i32
    return %c0_i32, %c0_i32_0 : i32, i32
  }
  func.func @transform_5(%arg0: i32) -> (i32, i32) {
    %c0_i32 = arith.constant 0 : i32
    %c0_i32_0 = arith.constant 0 : i32
    return %arg0, %c0_i32 : i32, i32
  }
  func.func @transform_6(%arg0: i32) -> (i32, i32) {
    %c0_i32 = arith.constant 0 : i32
    %c0_i32_0 = arith.constant 0 : i32
    %c0_i32_1 = arith.constant 0 : i32
    return %c0_i32, %c0_i32_0 : i32, i32
  }
}

</mosaic_0001>

<llo_original>
// kernel: tpu_custom_call.1
$region0: #{tpu_custom_call.1}
  #allocation0 [shape = 'u32[]', space=smem, size = 0x4, offset = 0x4, fixed_abs, tag = 'smem constant byte address 0x4 - core index']
  #allocation1 [shape = 'u32[144,128]{1,0:T(1,128)}', space=vmem, size = 0x12000, scoped, tag = 'internal scratch']
  #allocation2 [shape = 'f32[5,32]{1,0:T(8,128)}', space=vmem, size = 0x1000, scoped, tag = 'scratch operand']
  #allocation3 [shape = 'f32[5,32]{1,0:T(8,128)}', space=vmem, size = 0x1000, scoped, tag = 'scratch operand']
  #allocation4 [shape = 'f32[1,5]{1,0:T(1,128)}', space=vmem, size = 0x200, scoped, tag = 'scratch operand']
  #allocation5 [shape = 'f32[1,5]{1,0:T(1,128)}', space=vmem, size = 0x200, scoped, tag = 'scratch operand']
  #allocation6 [shape = 'f32[5,32]{1,0:T(8,128)}', space=vmem, size = 0x1000, scoped, tag = 'scratch operand']
  #allocation7 [shape = 'f32[1,5]{1,0:T(1,128)}', space=vmem, size = 0x200, scoped, tag = 'scratch operand']
  #allocation8 [shape = 's32[1,1]{1,0:T(1,128)S(6)}', space=smem, size = 0x200, scoped, tag = 'scoped memory for tpu_custom_call.1']
  %s0 = inlined_call_operand.vmem [shape: f32[1,2], index: 0, kind: input, shape index: {}]
  %s1 = inlined_call_operand.<no memory space> [shape: s32[1,1], index: 1, kind: input, shape index: {}]
  %s2 = inlined_call_operand.vmem [shape: f32[5,5,32], index: 2, kind: input, shape index: {}]
  %s3 = inlined_call_operand.vmem [shape: f32[5,5], index: 3, kind: input, shape index: {}]
  %s4 = inlined_call_operand.vmem [shape: f32[5,5], index: 4, kind: input, shape index: {}]
  %s5 = inlined_call_operand.vmem [shape: f32[175,32], index: 5, kind: input, shape index: {}]
  %s6 = inlined_call_operand.hbm [shape: f32[5,32], index: 6, kind: output, shape index: {}]
  %s7 = sld [smem:[#allocation0]]
  $region46: #{tpu_custom_call.1} parent=0
    _
  %s9 = ssub.s32 1, %s7
  %s10 = scalar_select 0, %s9, %s7
  %11 = sst [smem:[#allocation8]] %s1
  $region1: #{tpu_custom_call.1} parent=0
    #allocation9 [shape = 'u8[512]{0}', space=smem, size = 0x200, scoped, tag = 'input window, operand 0, single buffered']
    #allocation10 [shape = 's32[1]{0}', space=sflag, size = 0x4, scoped, tag = 'scoped memory for tpu_custom_call.1']
    #allocation11 [shape = 's32[1]{0}', space=sflag, size = 0x4, scoped, tag = 'scoped memory for tpu_custom_call.1']
    #allocation12 [shape = 'u8[4096]{0}', space=vmem, size = 0x1000, scoped, tag = 'output window, operand 0, single buffered']
    %12 = vsyncpa [#allocation11], 0
    %13 = vsyncpa [#allocation10], 0
    // Predicated region
    $region2: #{tpu_custom_call.1} parent=1 // pred_check
      _
    $region3: #{tpu_custom_call.1} parent=1 // pred_check_branch
      %15 = sbr.rel (0) target = $region5
    $region4: #{tpu_custom_call.1} parent=1 // pred_region
      %s17 = ssub.s32 16, 16
      %18 = vsyncadd [#allocation11], %s17
      %s20 = sshll.u32 %s0, 4
      %s21 = int_to_ptr.vmem [resolvable:$true] %s20
      %23 = dma.vmem_to_smem %s21, 16, [#allocation9], [#allocation11]
    $region5: #{tpu_custom_call.1} parent=1 // pred_fallthru
      _
    // Predicated region
    $region6: #{tpu_custom_call.1} parent=1 // pred_check
      _
    $region7: #{tpu_custom_call.1} parent=1 // pred_check_branch
      %25 = sbr.rel (0) target = $region9
    $region8: #{tpu_custom_call.1} parent=1 // pred_region
      _
    $region9: #{tpu_custom_call.1} parent=1 // pred_fallthru
      _
    // Predicated region
    $region10: #{tpu_custom_call.1} parent=1 // pred_check
      _
    $region11: #{tpu_custom_call.1} parent=1 // pred_check_branch
      %27 = sbr.rel (0) target = $region13
    $region12: #{tpu_custom_call.1} parent=1 // pred_region
      _
    $region13: #{tpu_custom_call.1} parent=1 // pred_fallthru
      _
    // Predicated region
    $region14: #{tpu_custom_call.1} parent=1 // pred_check
      _
    $region15: #{tpu_custom_call.1} parent=1 // pred_check_branch
      %29 = sbr.rel (0) target = $region17
    $region16: #{tpu_custom_call.1} parent=1 // pred_region
      _
    $region17: #{tpu_custom_call.1} parent=1 // pred_fallthru
      _
    // Predicated region
    $region18: #{tpu_custom_call.1} parent=1 // pred_check
      _
    $region19: #{tpu_custom_call.1} parent=1 // pred_check_branch
      %31 = sbr.rel (0) target = $region21
    $region20: #{tpu_custom_call.1} parent=1 // pred_region
      _
    $region21: #{tpu_custom_call.1} parent=1 // pred_fallthru
      _
    // Predicated region
    $region22: #{tpu_custom_call.1} parent=1 // pred_check
      _
    $region23: #{tpu_custom_call.1} parent=1 // pred_check_branch
      %33 = sbr.rel (0) target = $region25
    $region24: #{tpu_custom_call.1} parent=1 // pred_region
      _
    $region25: #{tpu_custom_call.1} parent=1 // pred_fallthru
      _
    // Predicated region
    $region26: #{tpu_custom_call.1} parent=1 // pred_check
      _
    $region27: #{tpu_custom_call.1} parent=1 // pred_check_branch
      %35 = sbr.rel (0) target = $region29
    $region28: #{tpu_custom_call.1} parent=1 // pred_region
      %36 = dma.done [#allocation11], 16
    $region29: #{tpu_custom_call.1} parent=1 // pred_fallthru
      _
    %37 = sfence
    %p38 = scmp.eq.s32.totalorder 0, 0
    // Predicated region
    $region30: #{tpu_custom_call.1} parent=1 // pred_check
      %p39 = pneg %p38
    $region31: #{tpu_custom_call.1} parent=1 // pred_check_branch
      %41 = sbr.rel (%p39) target = $region33
    $region32: #{tpu_custom_call.1} parent=1 // pred_region
      %v42 = vld [vmem:[%s2] sm:$0x1f]
      %v43 = vld [vmem:[%s2 + $0x8] sm:$0x1f]
      %v44 = vld [vmem:[%s2 + $0x10] sm:$0x1f]
      %v45 = vld [vmem:[%s2 + $0x18] sm:$0x1f]
      %v46 = vld [vmem:[%s2 + $0x20] sm:$0x1f]
      %v47 = vld [vmem:[%s3] sm:$0x1f]
      %v48 = vld [vmem:[%s4] sm:$0x1f]
      %vm49 = vcmask 36864
      %v50 = vsel %vm49, %v47, 0.0
      %51 = vadd.xlane.f32.xlu0 %v50
      %v52 = vpop.xlane.xlu0 %51
      %v53 = vrcp.pop %v52
      %v54 = vmul.f32 %v47, %v53
      %v55 = vsel %vm49, %v48, 0.0
      %56 = vadd.xlane.f32.xlu0 %v55
      %v57 = vpop.xlane.xlu0 %56
      %v58 = vrcp.pop %v57
      %v59 = vmul.f32 %v48, %v58
      %v60 = vadd.f32 %v59, %v54
      %v61 = vmul.f32 %v60, 0.5
      %v62 = vlaneseq
      %v63 = vshrl.u32 %v62, 7
      %v64 = vsub.s32 0, %v63
      %v65 = vrot.slane %v61, %v64
      %67 = vbcast.lane.b32.xlu0 %v65, 256
      %v68 = vpop.permute.xlu0 %67
      %v69 = vlaneseq
      %v70 = vshrl.u32 %v69, 7
      %v71 = vsub.s32 1, %v70
      %v72 = vrot.slane %v61, %v71
      %74 = vbcast.lane.b32.xlu0 %v72, 256
      %v75 = vpop.permute.xlu0 %74
      %v76 = vlaneseq
      %v77 = vshrl.u32 %v76, 7
      %v78 = vsub.s32 2, %v77
      %v79 = vrot.slane %v61, %v78
      %81 = vbcast.lane.b32.xlu0 %v79, 256
      %v82 = vpop.permute.xlu0 %81
      %v83 = vlaneseq
      %v84 = vshrl.u32 %v83, 7
      %v85 = vsub.s32 3, %v84
      %v86 = vrot.slane %v61, %v85
      %88 = vbcast.lane.b32.xlu0 %v86, 256
      %v89 = vpop.permute.xlu0 %88
      %v90 = vlaneseq
      %v91 = vshrl.u32 %v90, 7
      %v92 = vsub.s32 4, %v91
      %v93 = vrot.slane %v61, %v92
      %95 = vbcast.lane.b32.xlu0 %v93, 256
      %v96 = vpop.permute.xlu0 %95
      %v97 = vmul.f32 %v42, %v68
      %v98 = vmul.f32 %v43, %v75
      %v99 = vmul.f32 %v44, %v82
      %v100 = vmul.f32 %v45, %v89
      %v101 = vmul.f32 %v46, %v96
      %vm102 = vcmask 258048
      %v103 = vsel %vm102, %v97, 0.0
      %v104 = vrot.slane %v103, 4
      %v105 = vadd.f32 %v103, %v104
      %v106 = vrot.slane %v105, 2
      %v107 = vadd.f32 %v105, %v106
      %v108 = vrot.slane %v107, 1
      %v109 = vadd.f32 %v107, %v108
      %v110 = vsel %vm102, %v98, 0.0
      %v111 = vrot.slane %v110, 4
      %v112 = vadd.f32 %v110, %v111
      %v113 = vrot.slane %v112, 2
      %v114 = vadd.f32 %v112, %v113
      %v115 = vrot.slane %v114, 1
      %v116 = vadd.f32 %v114, %v115
      %v117 = vsel %vm102, %v99, 0.0
      %v118 = vrot.slane %v117, 4
      %v119 = vadd.f32 %v117, %v118
      %v120 = vrot.slane %v119, 2
      %v121 = vadd.f32 %v119, %v120
      %v122 = vrot.slane %v121, 1
      %v123 = vadd.f32 %v121, %v122
      %v124 = vsel %vm102, %v100, 0.0
      %v125 = vrot.slane %v124, 4
      %v126 = vadd.f32 %v124, %v125
      %v127 = vrot.slane %v126, 2
      %v128 = vadd.f32 %v126, %v127
      %v129 = vrot.slane %v128, 1
      %v130 = vadd.f32 %v128, %v129
      %v131 = vsel %vm102, %v101, 0.0
      %v132 = vrot.slane %v131, 4
      %v133 = vadd.f32 %v131, %v132
      %v134 = vrot.slane %v133, 2
      %v135 = vadd.f32 %v133, %v134
      %v136 = vrot.slane %v135, 1
      %v137 = vadd.f32 %v135, %v136
      %vm143 = vcmask 1041409
      %v144 = vsel %vm143, %v116, %v109
      %vm145 = vcmask 1042434
      %v146 = vsel %vm145, %v123, %v144
      %vm147 = vcmask 1043459
      %v148 = vsel %vm147, %v130, %v146
      %vm149 = vcmask 1044484
      %v150 = vsel %vm149, %v137, %v148
      %152 = vst.msk [vmem:[#allocation3] sm:$0x1f] %vm102, %v150
      %v153 = vsel %vm102, %v42, 0.0
      %v154 = vrot.slane %v153, 4
      %v155 = vadd.f32 %v153, %v154
      %v156 = vrot.slane %v155, 2
      %v157 = vadd.f32 %v155, %v156
      %v158 = vrot.slane %v157, 1
      %v159 = vadd.f32 %v157, %v158
      %v160 = vsel %vm102, %v43, 0.0
      %v161 = vrot.slane %v160, 4
      %v162 = vadd.f32 %v160, %v161
      %v163 = vrot.slane %v162, 2
      %v164 = vadd.f32 %v162, %v163
      %v165 = vrot.slane %v164, 1
      %v166 = vadd.f32 %v164, %v165
      %v167 = vsel %vm102, %v44, 0.0
      %v168 = vrot.slane %v167, 4
      %v169 = vadd.f32 %v167, %v168
      %v170 = vrot.slane %v169, 2
      %v171 = vadd.f32 %v169, %v170
      %v172 = vrot.slane %v171, 1
      %v173 = vadd.f32 %v171, %v172
      %v174 = vsel %vm102, %v45, 0.0
      %v175 = vrot.slane %v174, 4
      %v176 = vadd.f32 %v174, %v175
      %v177 = vrot.slane %v176, 2
      %v178 = vadd.f32 %v176, %v177
      %v179 = vrot.slane %v178, 1
      %v180 = vadd.f32 %v178, %v179
      %v181 = vsel %vm102, %v46, 0.0
      %v182 = vrot.slane %v181, 4
      %v183 = vadd.f32 %v181, %v182
      %v184 = vrot.slane %v183, 2
      %v185 = vadd.f32 %v183, %v184
      %v186 = vrot.slane %v185, 1
      %v187 = vadd.f32 %v185, %v186
      %v188 = vrcp.pop 5.0
      %v189 = vmul.f32 %v159, %v188
      %v190 = vmul.f32 %v166, %v188
      %v191 = vmul.f32 %v173, %v188
      %v192 = vmul.f32 %v180, %v188
      %v193 = vmul.f32 %v187, %v188
      %v199 = vsel %vm143, %v190, %v189
      %v200 = vsel %vm145, %v191, %v199
      %v201 = vsel %vm147, %v192, %v200
      %v202 = vsel %vm149, %v193, %v201
      %204 = vst.msk [vmem:[#allocation2] sm:$0x1f] %vm102, %v202
      %v205 = vmul.f32 %v189, %v189
      %v206 = vmul.f32 %v190, %v190
      %v207 = vmul.f32 %v191, %v191
      %v208 = vmul.f32 %v192, %v192
      %v209 = vmul.f32 %v193, %v193
      %v215 = vsel %vm143, %v206, %v205
      %v216 = vsel %vm145, %v207, %v215
      %v217 = vsel %vm147, %v208, %v216
      %v218 = vsel %vm149, %v209, %v217
      %v220 = vsel %vm102, %v218, 0.0
      %221 = vadd.xlane.f32.xlu0 %v220
      %v222 = vpop.xlane.xlu0 %221
      %v224 = vlaneseq
      %v225 = vand.u32 %v224, 127
      %v226 = vlaneseq
      %v227 = vshrl.u32 %v226, 7
      %v228 = vsub.s32 %v225, %v227
      %v229 = vrot.slane %v222, %v228
      %vm231 = vcmask 32768
      %232 = vst.msk [vmem:[#allocation5] sm:$0x1] %vm231, %v229
      %v233 = vmul.f32 %v42, %v189
      %v234 = vmul.f32 %v43, %v190
      %v235 = vmul.f32 %v44, %v191
      %v236 = vmul.f32 %v45, %v192
      %v237 = vmul.f32 %v46, %v193
      %v238 = vsel %vm102, %v233, 0.0
      %239 = vadd.xlane.f32.xlu0 %v238
      %v240 = vpop.xlane.xlu0 %239
      %v241 = vsel %vm102, %v234, 0.0
      %242 = vadd.xlane.f32.xlu0 %v241
      %v243 = vpop.xlane.xlu0 %242
      %v244 = vsel %vm102, %v235, 0.0
      %245 = vadd.xlane.f32.xlu0 %v244
      %v246 = vpop.xlane.xlu0 %245
      %v247 = vsel %vm102, %v236, 0.0
      %248 = vadd.xlane.f32.xlu0 %v247
      %v249 = vpop.xlane.xlu0 %248
      %v250 = vsel %vm102, %v237, 0.0
      %251 = vadd.xlane.f32.xlu0 %v250
      %v252 = vpop.xlane.xlu0 %251
      %v253 = vmul.f32 %v42, %v42
      %v254 = vmul.f32 %v43, %v43
      %v255 = vmul.f32 %v44, %v44
      %v256 = vmul.f32 %v45, %v45
      %v257 = vmul.f32 %v46, %v46
      %v258 = vsel %vm102, %v253, 0.0
      %259 = vadd.xlane.f32.xlu0 %v258
      %v260 = vpop.xlane.xlu0 %259
      %v261 = vsel %vm102, %v254, 0.0
      %262 = vadd.xlane.f32.xlu0 %v261
      %v263 = vpop.xlane.xlu0 %262
      %v264 = vsel %vm102, %v255, 0.0
      %265 = vadd.xlane.f32.xlu0 %v264
      %v266 = vpop.xlane.xlu0 %265
      %v267 = vsel %vm102, %v256, 0.0
      %268 = vadd.xlane.f32.xlu0 %v267
      %v269 = vpop.xlane.xlu0 %268
      %v270 = vsel %vm102, %v257, 0.0
      %271 = vadd.xlane.f32.xlu0 %v270
      %v272 = vpop.xlane.xlu0 %271
      %v273 = vlaneseq
      %v274 = vshrl.u32 %v273, 7
      %v275 = vsub.s32 0, %v274
      %v276 = vrot.slane %v222, %v275
      %v277 = vlaneseq
      %v278 = vshrl.u32 %v277, 7
      %v279 = vsub.s32 1, %v278
      %v280 = vrot.slane %v222, %v279
      %v281 = vlaneseq
      %v282 = vshrl.u32 %v281, 7
      %v283 = vsub.s32 2, %v282
      %v284 = vrot.slane %v222, %v283
      %v285 = vlaneseq
      %v286 = vshrl.u32 %v285, 7
      %v287 = vsub.s32 3, %v286
      %v288 = vrot.slane %v222, %v287
      %v289 = vlaneseq
      %v290 = vshrl.u32 %v289, 7
      %v291 = vsub.s32 4, %v290
      %v292 = vrot.slane %v222, %v291
      %v298 = vmul.f32 %v260, %v276
      %v299 = vmul.f32 %v263, %v280
      %v300 = vmul.f32 %v266, %v284
      %v301 = vmul.f32 %v269, %v288
      %v302 = vmul.f32 %v272, %v292
      %v303 = vmax.f32 %v298, 1e-16
      %v304 = vmax.f32 %v299, 1e-16
      %v305 = vmax.f32 %v300, 1e-16
      %v306 = vmax.f32 %v301, 1e-16
      %v307 = vmax.f32 %v302, 1e-16
      %v308 = vrsqrt.pop %v303
      %v309 = vrsqrt.pop %v304
      %v310 = vrsqrt.pop %v305
      %v311 = vrsqrt.pop %v306
      %v312 = vrsqrt.pop %v307
      %v313 = vmul.f32 %v240, %v308
      %v314 = vmul.f32 %v243, %v309
      %v315 = vmul.f32 %v246, %v310
      %v316 = vmul.f32 %v249, %v311
      %v317 = vmul.f32 %v252, %v312
      %s318 = sld [smem:[#allocation9 + $0x1]]
      %324 = vset.pattern.permute.xlu0 0
      %325 = vperm.xlu0 %324, %v313
      %v326 = vpop.permute.xlu0 %325
      %327 = vset.pattern.permute.xlu0 0
      %328 = vperm.xlu0 %327, %v314
      %v329 = vpop.permute.xlu0 %328
      %330 = vset.pattern.permute.xlu0 0
      %331 = vperm.xlu0 %330, %v315
      %v332 = vpop.permute.xlu0 %331
      %333 = vset.pattern.permute.xlu0 0
      %334 = vperm.xlu0 %333, %v316
      %v335 = vpop.permute.xlu0 %334
      %336 = vset.pattern.permute.xlu0 0
      %337 = vperm.xlu0 %336, %v317
      %v338 = vpop.permute.xlu0 %337
      %v339 = vlaneseq
      %v340 = vshrl.u32 %v339, 7
      %v341 = vsub.s32 %v225, %v340
      %v342 = vrot.slane %v326, %v341
      %v343 = vlaneseq
      %v344 = vshrl.u32 %v343, 7
      %v345 = vsub.s32 %v225, %v344
      %v346 = vrot.slane %v329, %v345
      %v347 = vlaneseq
      %v348 = vshrl.u32 %v347, 7
      %v349 = vsub.s32 %v225, %v348
      %v350 = vrot.slane %v332, %v349
      %v351 = vlaneseq
      %v352 = vshrl.u32 %v351, 7
      %v353 = vsub.s32 %v225, %v352
      %v354 = vrot.slane %v335, %v353
      %v355 = vlaneseq
      %v356 = vshrl.u32 %v355, 7
      %v357 = vsub.s32 %v225, %v356
      %v358 = vrot.slane %v338, %v357
      %v359 = vsel %vm143, %v346, %v342
      %v360 = vsel %vm145, %v350, %v359
      %v361 = vsel %vm147, %v354, %v360
      %v362 = vsel %vm149, %v358, %v361
      %v364 = vsel %vm49, %v362, 0.0
      %365 = vadd.xlane.f32.xlu0 %v364
      %v366 = vpop.xlane.xlu0 %365
      %v367 = vmul.f32 %v366, %v188
      %v368 = vstv %s318
      %v369 = vmul.f32 %v368, %v367
      %v371 = vlaneseq
      %v372 = vshrl.u32 %v371, 7
      %v373 = vsub.s32 %v225, %v372
      %v374 = vrot.slane %v369, %v373
      %376 = vst.msk [vmem:[#allocation4] sm:$0x1] %vm231, %v374
      %377 = vst.msk [vmem:[#allocation6] sm:$0x1f] %vm102, 0.0
      %378 = vst.msk [vmem:[#allocation7] sm:$0x1] %vm231, 0.0
    $region33: #{tpu_custom_call.1} parent=1 // pred_fallthru
      _
    %s379 = sld [smem:[#allocation8]]
    %s380 = smul.u32 0, 176
    %v381 = vlaneseq
    %v382 = vshrl.u32 %v381, 7
    %v383 = vadd.s32 %v382, 8
    %v384 = vadd.s32 %v382, 16
    %v385 = vadd.s32 %v382, 24
    %v386 = vadd.s32 %v382, 32
    %v387 = vadd.s32 %v382, 40
    %v388 = vadd.s32 %v382, 48
    %v389 = vadd.s32 %v382, 56
    %v390 = vadd.s32 %v382, 64
    %v391 = vadd.s32 %v382, 72
    %v392 = vadd.s32 %v382, 80
    %v393 = vadd.s32 %v382, 88
    %v394 = vadd.s32 %v382, 96
    %v395 = vadd.s32 %v382, 104
    %v396 = vadd.s32 %v382, 112
    %v397 = vadd.s32 %v382, 120
    %v398 = vadd.s32 %v382, 128
    %v399 = vadd.s32 %v382, 136
    %v400 = vadd.s32 %v382, 144
    %v401 = vadd.s32 %v382, 152
    %v402 = vadd.s32 %v382, 160
    %v403 = vadd.s32 %v382, 168
    %v404 = vstv %s380
    %v405 = vadd.s32 %v404, %v382
    %v406 = vadd.s32 %v404, %v383
    %v407 = vadd.s32 %v404, %v384
    %v408 = vadd.s32 %v404, %v385
    %v409 = vadd.s32 %v404, %v386
    %v410 = vadd.s32 %v404, %v387
    %v411 = vadd.s32 %v404, %v388
    %v412 = vadd.s32 %v404, %v389
    %v413 = vadd.s32 %v404, %v390
    %v414 = vadd.s32 %v404, %v391
    %v415 = vadd.s32 %v404, %v392
    %v416 = vadd.s32 %v404, %v393
    %v417 = vadd.s32 %v404, %v394
    %v418 = vadd.s32 %v404, %v395
    %v419 = vadd.s32 %v404, %v396
    %v420 = vadd.s32 %v404, %v397
    %v421 = vadd.s32 %v404, %v398
    %v422 = vadd.s32 %v404, %v399
    %v423 = vadd.s32 %v404, %v400
    %v424 = vadd.s32 %v404, %v401
    %v425 = vadd.s32 %v404, %v402
    %v426 = vadd.s32 %v404, %v403
    %v427 = vstv %s379
    %vm428 = vcmp.lt.s32.totalorder %v405, %v427
    %vm429 = vcmp.lt.s32.totalorder %v406, %v427
    %vm430 = vcmp.lt.s32.totalorder %v407, %v427
    %vm431 = vcmp.lt.s32.totalorder %v408, %v427
    %vm432 = vcmp.lt.s32.totalorder %v409, %v427
    %vm433 = vcmp.lt.s32.totalorder %v410, %v427
    %vm434 = vcmp.lt.s32.totalorder %v411, %v427
    %vm435 = vcmp.lt.s32.totalorder %v412, %v427
    %vm436 = vcmp.lt.s32.totalorder %v413, %v427
    %vm437 = vcmp.lt.s32.totalorder %v414, %v427
    %vm438 = vcmp.lt.s32.totalorder %v415, %v427
    %vm439 = vcmp.lt.s32.totalorder %v416, %v427
    %vm440 = vcmp.lt.s32.totalorder %v417, %v427
    %vm441 = vcmp.lt.s32.totalorder %v418, %v427
    %vm442 = vcmp.lt.s32.totalorder %v419, %v427
    %vm443 = vcmp.lt.s32.totalorder %v420, %v427
    %vm444 = vcmp.lt.s32.totalorder %v421, %v427
    %vm445 = vcmp.lt.s32.totalorder %v422, %v427
    %vm446 = vcmp.lt.s32.totalorder %v423, %v427
    %vm447 = vcmp.lt.s32.totalorder %v424, %v427
    %vm448 = vcmp.lt.s32.totalorder %v425, %v427
    %vm449 = vcmp.lt.s32.totalorder %v426, %v427
    %v450 = vld [vmem:[%s5] sm:$0xff]
    %v451 = vld [vmem:[%s5 + $0x8] sm:$0xff]
    %v452 = vld [vmem:[%s5 + $0x10] sm:$0xff]
    %v453 = vld [vmem:[%s5 + $0x18] sm:$0xff]
    %v454 = vld [vmem:[%s5 + $0x20] sm:$0xff]
    %v455 = vld [vmem:[%s5 + $0x28] sm:$0xff]
    %v456 = vld [vmem:[%s5 + $0x30] sm:$0xff]
    %v457 = vld [vmem:[%s5 + $0x38] sm:$0xff]
    %v458 = vld [vmem:[%s5 + $0x40] sm:$0xff]
    %v459 = vld [vmem:[%s5 + $0x48] sm:$0xff]
    %v460 = vld [vmem:[%s5 + $0x50] sm:$0xff]
    %v461 = vld [vmem:[%s5 + $0x58] sm:$0xff]
    %v462 = vld [vmem:[%s5 + $0x60] sm:$0xff]
    %v463 = vld [vmem:[%s5 + $0x68] sm:$0xff]
    %v464 = vld [vmem:[%s5 + $0x70] sm:$0xff]
    %v465 = vld [vmem:[%s5 + $0x78] sm:$0xff]
    %v466 = vld [vmem:[%s5 + $0x80] sm:$0xff]
    %v467 = vld [vmem:[%s5 + $0x88] sm:$0xff]
    %v468 = vld [vmem:[%s5 + $0x90] sm:$0xff]
    %v469 = vld [vmem:[%s5 + $0x98] sm:$0xff]
    %v470 = vld [vmem:[%s5 + $0xa0] sm:$0xff]
    %v471 = vld [vmem:[%s5 + $0xa8] sm:$0xff]
    %v472 = vsel %vm428, 1, 0
    %v473 = vsel %vm429, 1, 0
    %v474 = vsel %vm430, 1, 0
    %v475 = vsel %vm431, 1, 0
    %v476 = vsel %vm432, 1, 0
    %v477 = vsel %vm433, 1, 0
    %v478 = vsel %vm434, 1, 0
    %v479 = vsel %vm435, 1, 0
    %v480 = vsel %vm436, 1, 0
    %v481 = vsel %vm437, 1, 0
    %v482 = vsel %vm438, 1, 0
    %v483 = vsel %vm439, 1, 0
    %v484 = vsel %vm440, 1, 0
    %v485 = vsel %vm441, 1, 0
    %v486 = vsel %vm442, 1, 0
    %v487 = vsel %vm443, 1, 0
    %v488 = vsel %vm444, 1, 0
    %v489 = vsel %vm445, 1, 0
    %v490 = vsel %vm446, 1, 0
    %v491 = vsel %vm447, 1, 0
    %v492 = vsel %vm448, 1, 0
    %v493 = vsel %vm449, 1, 0
    %vm494 = vcmp.eq.s32.totalorder %v472, 1
    %vm495 = vcmp.eq.s32.totalorder %v473, 1
    %vm496 = vcmp.eq.s32.totalorder %v474, 1
    %vm497 = vcmp.eq.s32.totalorder %v475, 1
    %vm498 = vcmp.eq.s32.totalorder %v476, 1
    %vm499 = vcmp.eq.s32.totalorder %v477, 1
    %vm500 = vcmp.eq.s32.totalorder %v478, 1
    %vm501 = vcmp.eq.s32.totalorder %v479, 1
    %vm502 = vcmp.eq.s32.totalorder %v480, 1
    %vm503 = vcmp.eq.s32.totalorder %v481, 1
    %vm504 = vcmp.eq.s32.totalorder %v482, 1
    %vm505 = vcmp.eq.s32.totalorder %v483, 1
    %vm506 = vcmp.eq.s32.totalorder %v484, 1
    %vm507 = vcmp.eq.s32.totalorder %v485, 1
    %vm508 = vcmp.eq.s32.totalorder %v486, 1
    %vm509 = vcmp.eq.s32.totalorder %v487, 1
    %vm510 = vcmp.eq.s32.totalorder %v488, 1
    %vm511 = vcmp.eq.s32.totalorder %v489, 1
    %vm512 = vcmp.eq.s32.totalorder %v490, 1
    %vm513 = vcmp.eq.s32.totalorder %v491, 1
    %vm514 = vcmp.eq.s32.totalorder %v492, 1
    %vm515 = vcmp.eq.s32.totalorder %v493, 1
    %v516 = vsel %vm494, %v450, 0.0
    %v517 = vsel %vm495, %v451, 0.0
    %v518 = vsel %vm496, %v452, 0.0
    %v519 = vsel %vm497, %v453, 0.0
    %v520 = vsel %vm498, %v454, 0.0
    %v521 = vsel %vm499, %v455, 0.0
    %v522 = vsel %vm500, %v456, 0.0
    %v523 = vsel %vm501, %v457, 0.0
    %v524 = vsel %vm502, %v458, 0.0
    %v525 = vsel %vm503, %v459, 0.0
    %v526 = vsel %vm504, %v460, 0.0
    %v527 = vsel %vm505, %v461, 0.0
    %v528 = vsel %vm506, %v462, 0.0
    %v529 = vsel %vm507, %v463, 0.0
    %v530 = vsel %vm508, %v464, 0.0
    %v531 = vsel %vm509, %v465, 0.0
    %v532 = vsel %vm510, %v466, 0.0
    %v533 = vsel %vm511, %v467, 0.0
    %v534 = vsel %vm512, %v468, 0.0
    %v535 = vsel %vm513, %v469, 0.0
    %v536 = vsel %vm514, %v470, 0.0
    %v537 = vsel %vm515, %v471, 0.0
    %v538 = vld [vmem:[#allocation2] sm:$0x1f]
    %v539 = vmul.f32 %v516, %v516
    %v540 = vmul.f32 %v517, %v517
    %v541 = vmul.f32 %v518, %v518
    %v542 = vmul.f32 %v519, %v519
    %v543 = vmul.f32 %v520, %v520
    %v544 = vmul.f32 %v521, %v521
    %v545 = vmul.f32 %v522, %v522
    %v546 = vmul.f32 %v523, %v523
    %v547 = vmul.f32 %v524, %v524
    %v548 = vmul.f32 %v525, %v525
    %v549 = vmul.f32 %v526, %v526
    %v550 = vmul.f32 %v527, %v527
    %v551 = vmul.f32 %v528, %v528
    %v552 = vmul.f32 %v529, %v529
    %v553 = vmul.f32 %v530, %v530
    %v554 = vmul.f32 %v531, %v531
    %v555 = vmul.f32 %v532, %v532
    %v556 = vmul.f32 %v533, %v533
    %v557 = vmul.f32 %v534, %v534
    %v558 = vmul.f32 %v535, %v535
    %v559 = vmul.f32 %v536, %v536
    %v560 = vmul.f32 %v537, %v537
    %vm561 = vcmask 261120
    %v562 = vsel %vm561, %v539, 0.0
    %563 = vadd.xlane.f32.xlu0 %v562
    %v564 = vpop.xlane.xlu0 %563
    %v565 = vsel %vm561, %v540, 0.0
    %566 = vadd.xlane.f32.xlu0 %v565
    %v567 = vpop.xlane.xlu0 %566
    %v568 = vsel %vm561, %v541, 0.0
    %569 = vadd.xlane.f32.xlu0 %v568
    %v570 = vpop.xlane.xlu0 %569
    %v571 = vsel %vm561, %v542, 0.0
    %572 = vadd.xlane.f32.xlu0 %v571
    %v573 = vpop.xlane.xlu0 %572
    %v574 = vsel %vm561, %v543, 0.0
    %575 = vadd.xlane.f32.xlu0 %v574
    %v576 = vpop.xlane.xlu0 %575
    %v577 = vsel %vm561, %v544, 0.0
    %578 = vadd.xlane.f32.xlu0 %v577
    %v579 = vpop.xlane.xlu0 %578
    %v580 = vsel %vm561, %v545, 0.0
    %581 = vadd.xlane.f32.xlu0 %v580
    %v582 = vpop.xlane.xlu0 %581
    %v583 = vsel %vm561, %v546, 0.0
    %584 = vadd.xlane.f32.xlu0 %v583
    %v585 = vpop.xlane.xlu0 %584
    %v586 = vsel %vm561, %v547, 0.0
    %587 = vadd.xlane.f32.xlu0 %v586
    %v588 = vpop.xlane.xlu0 %587
    %v589 = vsel %vm561, %v548, 0.0
    %590 = vadd.xlane.f32.xlu0 %v589
    %v591 = vpop.xlane.xlu0 %590
    %v592 = vsel %vm561, %v549, 0.0
    %593 = vadd.xlane.f32.xlu0 %v592
    %v594 = vpop.xlane.xlu0 %593
    %v595 = vsel %vm561, %v550, 0.0
    %596 = vadd.xlane.f32.xlu0 %v595
    %v597 = vpop.xlane.xlu0 %596
    %v598 = vsel %vm561, %v551, 0.0
    %599 = vadd.xlane.f32.xlu0 %v598
    %v600 = vpop.xlane.xlu0 %599
    %v601 = vsel %vm561, %v552, 0.0
    %602 = vadd.xlane.f32.xlu0 %v601
    %v603 = vpop.xlane.xlu0 %602
    %v604 = vsel %vm561, %v553, 0.0
    %605 = vadd.xlane.f32.xlu0 %v604
    %v606 = vpop.xlane.xlu0 %605
    %v607 = vsel %vm561, %v554, 0.0
    %608 = vadd.xlane.f32.xlu0 %v607
    %v609 = vpop.xlane.xlu0 %608
    %v610 = vsel %vm561, %v555, 0.0
    %611 = vadd.xlane.f32.xlu0 %v610
    %v612 = vpop.xlane.xlu0 %611
    %v613 = vsel %vm561, %v556, 0.0
    %614 = vadd.xlane.f32.xlu0 %v613
    %v615 = vpop.xlane.xlu0 %614
    %v616 = vsel %vm561, %v557, 0.0
    %617 = vadd.xlane.f32.xlu0 %v616
    %v618 = vpop.xlane.xlu0 %617
    %v619 = vsel %vm561, %v558, 0.0
    %620 = vadd.xlane.f32.xlu0 %v619
    %v621 = vpop.xlane.xlu0 %620
    %v622 = vsel %vm561, %v559, 0.0
    %623 = vadd.xlane.f32.xlu0 %v622
    %v624 = vpop.xlane.xlu0 %623
    %v625 = vsel %vm561, %v560, 0.0
    %626 = vadd.xlane.f32.xlu0 %v625
    %v627 = vpop.xlane.xlu0 %626
    %v629 = vsel %vm561, %v516, 0
    %v632 = vsel %vm561, %v517, 0
    %v635 = vsel %vm561, %v518, 0
    %v638 = vsel %vm561, %v519, 0
    %v641 = vsel %vm561, %v520, 0
    %v644 = vsel %vm561, %v521, 0
    %v647 = vsel %vm561, %v522, 0
    %v650 = vsel %vm561, %v523, 0
    %v653 = vsel %vm561, %v524, 0
    %v656 = vsel %vm561, %v525, 0
    %v659 = vsel %vm561, %v526, 0
    %v662 = vsel %vm561, %v527, 0
    %v665 = vsel %vm561, %v528, 0
    %v668 = vsel %vm561, %v529, 0
    %v671 = vsel %vm561, %v530, 0
    %v674 = vsel %vm561, %v531, 0
    %v677 = vsel %vm561, %v532, 0
    %v680 = vsel %vm561, %v533, 0
    %v683 = vsel %vm561, %v534, 0
    %v686 = vsel %vm561, %v535, 0
    %v689 = vsel %vm561, %v536, 0
    %v692 = vsel %vm561, %v537, 0
    %v695 = vsel %vm561, %v538, 0
    %697 = vmatprep.subr.mxu0 0.0
    %698 = vmatpush1.xpose.msra.mxu0 %v695
    %699 = vmatprep.subr.mxu0 0.0
    %700 = vmatpush1.xpose.msra.mxu0 0.0
    %701 = vmatprep.subr.mxu0 0.0
    %702 = vmatpush1.xpose.msra.mxu0 0.0
    %703 = vmatprep.subr.mxu0 0.0
    %704 = vmatpush1.xpose.msra.mxu0 0.0
    %705 = vmatprep.subr.mxu0 0.0
    %706 = vmatpush1.xpose.msra.mxu0 0.0
    %707 = vmatprep.subr.mxu0 0.0
    %708 = vmatpush1.xpose.msra.mxu0 0.0
    %709 = vmatprep.subr.mxu0 0.0
    %710 = vmatpush1.xpose.msra.mxu0 0.0
    %711 = vmatprep.subr.mxu0 0.0
    %712 = vmatpush1.xpose.msra.mxu0 0.0
    %713 = vmatprep.subr.mxu0 0.0
    %714 = vmatpush1.xpose.msra.mxu0 0.0
    %715 = vmatprep.subr.mxu0 0.0
    %716 = vmatpush1.xpose.msra.mxu0 0.0
    %717 = vmatprep.subr.mxu0 0.0
    %718 = vmatpush1.xpose.msra.mxu0 0.0
    %719 = vmatprep.subr.mxu0 0.0
    %720 = vmatpush1.xpose.msra.mxu0 0.0
    %721 = vmatprep.subr.mxu0 0.0
    %722 = vmatpush1.xpose.msra.mxu0 0.0
    %723 = vmatprep.subr.mxu0 0.0
    %724 = vmatpush1.xpose.msra.mxu0 0.0
    %725 = vmatprep.subr.mxu0 0.0
    %726 = vmatpush1.xpose.msra.mxu0 0.0
    %727 = vmatprep.subr.mxu0 0.0
    %728 = vmatpush1.xpose.msra.mxu0 0.0
    %729 = vmatprep.subr.mxu0 0.0
    %730 = vmatpush1.xpose.msra.mxu0 0.0
    %731 = vmatprep.subr.mxu0 0.0
    %732 = vmatpush1.xpose.msra.mxu0 0.0
    %733 = vmatprep.subr.mxu0 0.0
    %734 = vmatpush1.xpose.msra.mxu0 0.0
    %735 = vmatprep.subr.mxu0 0.0
    %736 = vmatpush1.xpose.msra.mxu0 0.0
    %737 = vmatprep.subr.mxu0 0.0
    %738 = vmatpush1.xpose.msra.mxu0 0.0
    %739 = vmatprep.subr.mxu0 0.0
    %740 = vmatpush1.xpose.msra.mxu0 0.0
    %741 = vmatprep.subr.mxu0 0.0
    %742 = vmatpush1.xpose.msra.mxu0 0.0
    %743 = vmatprep.subr.mxu0 0.0
    %744 = vmatpush1.xpose.msra.mxu0 0.0
    %745 = vmatprep.subr.mxu0 0.0
    %746 = vmatpush1.xpose.msra.mxu0 0.0
    %747 = vmatprep.subr.mxu0 0.0
    %748 = vmatpush1.xpose.msra.mxu0 0.0
    %749 = vmatprep.subr.mxu0 0.0
    %750 = vmatpush1.xpose.msra.mxu0 0.0
    %751 = vmatprep.subr.mxu0 0.0
    %752 = vmatpush1.xpose.msra.mxu0 0.0
    %753 = vmatprep.subr.mxu0 0.0
    %754 = vmatpush1.xpose.msra.mxu0 0.0
    %755 = vmatprep.subr.mxu0 0.0
    %756 = vmatpush1.xpose.msra.mxu0 0.0
    %757 = vmatprep.subr.mxu0 0.0
    %758 = vmatpush1.xpose.msra.mxu0 0.0
    %759 = vmatprep.subr.mxu0 0.0
    %760 = vmatpush1.xpose.msra.mxu0 0.0
    %761 = vmatprep.mubr.f32.mxu0 0.0
    %762 = vmatmul.mubr.f32.gmra.mrb[0].mxu0 %v629
    %v763 = vpop.f32.mrb[0].mxu0
    %v764 = vadd.f32 0.0, %v763
    %v765 = vpop.f32.mrb[0].mxu0
    %766 = vmatprep.mubr.f32.mxu0 0.0
    %767 = vmatmul.mubr.f32.gmra.mrb[0].mxu0 %v632
    %v768 = vpop.f32.mrb[0].mxu0
    %v769 = vadd.f32 0.0, %v768
    %v770 = vpop.f32.mrb[0].mxu0
    %771 = vmatprep.mubr.f32.mxu0 0.0
    %772 = vmatmul.mubr.f32.gmra.mrb[0].mxu0 %v635
    %v773 = vpop.f32.mrb[0].mxu0
    %v774 = vadd.f32 0.0, %v773
    %v775 = vpop.f32.mrb[0].mxu0
    %776 = vmatprep.mubr.f32.mxu0 0.0
    %777 = vmatmul.mubr.f32.gmra.mrb[0].mxu0 %v638
    %v778 = vpop.f32.mrb[0].mxu0
    %v779 = vadd.f32 0.0, %v778
    %v780 = vpop.f32.mrb[0].mxu0
    %781 = vmatprep.mubr.f32.mxu0 0.0
    %782 = vmatmul.mubr.f32.gmra.mrb[0].mxu0 %v641
    %v783 = vpop.f32.mrb[0].mxu0
    %v784 = vadd.f32 0.0, %v783
    %v785 = vpop.f32.mrb[0].mxu0
    %786 = vmatprep.mubr.f32.mxu0 0.0
    %787 = vmatmul.mubr.f32.gmra.mrb[0].mxu0 %v644
    %v788 = vpop.f32.mrb[0].mxu0
    %v789 = vadd.f32 0.0, %v788
    %v790 = vpop.f32.mrb[0].mxu0
    %791 = vmatprep.mubr.f32.mxu0 0.0
    %792 = vmatmul.mubr.f32.gmra.mrb[0].mxu0 %v647
    %v793 = vpop.f32.mrb[0].mxu0
    %v794 = vadd.f32 0.0, %v793
    %v795 = vpop.f32.mrb[0].mxu0
    %796 = vmatprep.mubr.f32.mxu0 0.0
    %797 = vmatmul.mubr.f32.gmra.mrb[0].mxu0 %v650
    %v798 = vpop.f32.mrb[0].mxu0
    %v799 = vadd.f32 0.0, %v798
    %v800 = vpop.f32.mrb[0].mxu0
    %801 = vmatprep.mubr.f32.mxu0 0.0
    %802 = vmatmul.mubr.f32.gmra.mrb[0].mxu0 %v653
    %v803 = vpop.f32.mrb[0].mxu0
    %v804 = vadd.f32 0.0, %v803
    %v805 = vpop.f32.mrb[0].mxu0
    %806 = vmatprep.mubr.f32.mxu0 0.0
    %807 = vmatmul.mubr.f32.gmra.mrb[0].mxu0 %v656
    %v808 = vpop.f32.mrb[0].mxu0
    %v809 = vadd.f32 0.0, %v808
    %v810 = vpop.f32.mrb[0].mxu0
    %811 = vmatprep.mubr.f32.mxu0 0.0
    %812 = vmatmul.mubr.f32.gmra.mrb[0].mxu0 %v659
    %v813 = vpop.f32.mrb[0].mxu0
    %v814 = vadd.f32 0.0, %v813
    %v815 = vpop.f32.mrb[0].mxu0
    %816 = vmatprep.mubr.f32.mxu0 0.0
    %817 = vmatmul.mubr.f32.gmra.mrb[0].mxu0 %v662
    %v818 = vpop.f32.mrb[0].mxu0
    %v819 = vadd.f32 0.0, %v818
    %v820 = vpop.f32.mrb[0].mxu0
    %821 = vmatprep.mubr.f32.mxu0 0.0
    %822 = vmatmul.mubr.f32.gmra.mrb[0].mxu0 %v665
    %v823 = vpop.f32.mrb[0].mxu0
    %v824 = vadd.f32 0.0, %v823
    %v825 = vpop.f32.mrb[0].mxu0
    %826 = vmatprep.mubr.f32.mxu0 0.0
    %827 = vmatmul.mubr.f32.gmra.mrb[0].mxu0 %v668
    %v828 = vpop.f32.mrb[0].mxu0
    %v829 = vadd.f32 0.0, %v828
    %v830 = vpop.f32.mrb[0].mxu0
    %831 = vmatprep.mubr.f32.mxu0 0.0
    %832 = vmatmul.mubr.f32.gmra.mrb[0].mxu0 %v671
    %v833 = vpop.f32.mrb[0].mxu0
    %v834 = vadd.f32 0.0, %v833
    %v835 = vpop.f32.mrb[0].mxu0
    %836 = vmatprep.mubr.f32.mxu0 0.0
    %837 = vmatmul.mubr.f32.gmra.mrb[0].mxu0 %v674
    %v838 = vpop.f32.mrb[0].mxu0
    %v839 = vadd.f32 0.0, %v838
    %v840 = vpop.f32.mrb[0].mxu0
    %841 = vmatprep.mubr.f32.mxu0 0.0
    %842 = vmatmul.mubr.f32.gmra.mrb[0].mxu0 %v677
    %v843 = vpop.f32.mrb[0].mxu0
    %v844 = vadd.f32 0.0, %v843
    %v845 = vpop.f32.mrb[0].mxu0
    %846 = vmatprep.mubr.f32.mxu0 0.0
    %847 = vmatmul.mubr.f32.gmra.mrb[0].mxu0 %v680
    %v848 = vpop.f32.mrb[0].mxu0
    %v849 = vadd.f32 0.0, %v848
    %v850 = vpop.f32.mrb[0].mxu0
    %851 = vmatprep.mubr.f32.mxu0 0.0
    %852 = vmatmul.mubr.f32.gmra.mrb[0].mxu0 %v683
    %v853 = vpop.f32.mrb[0].mxu0
    %v854 = vadd.f32 0.0, %v853
    %v855 = vpop.f32.mrb[0].mxu0
    %856 = vmatprep.mubr.f32.mxu0 0.0
    %857 = vmatmul.mubr.f32.gmra.mrb[0].mxu0 %v686
    %v858 = vpop.f32.mrb[0].mxu0
    %v859 = vadd.f32 0.0, %v858
    %v860 = vpop.f32.mrb[0].mxu0
    %861 = vmatprep.mubr.f32.mxu0 0.0
    %862 = vmatmul.mubr.f32.gmra.mrb[0].mxu0 %v689
    %v863 = vpop.f32.mrb[0].mxu0
    %v864 = vadd.f32 0.0, %v863
    %v865 = vpop.f32.mrb[0].mxu0
    %866 = vmatprep.mubr.f32.mxu0 0.0
    %867 = vmatmul.mubr.f32.gmra.mrb[0].mxu0 %v692
    %v868 = vpop.f32.mrb[0].mxu0
    %v869 = vadd.f32 0.0, %v868
    %v870 = vpop.f32.mrb[0].mxu0
    %871 = vdwg.mxu0
    %v872 = vld [vmem:[#allocation5] sm:$0x1]
    %v874 = vlaneseq
    %v875 = vshrl.u32 %v874, 7
    %v876 = vsub.s32 0, %v875
    %v877 = vrot.slane %v872, %v876
    %v879 = vmul.f32 %v564, %v877
    %v880 = vmul.f32 %v567, %v877
    %v881 = vmul.f32 %v570, %v877
    %v882 = vmul.f32 %v573, %v877
    %v883 = vmul.f32 %v576, %v877
    %v884 = vmul.f32 %v579, %v877
    %v885 = vmul.f32 %v582, %v877
    %v886 = vmul.f32 %v585, %v877
    %v887 = vmul.f32 %v588, %v877
    %v888 = vmul.f32 %v591, %v877
    %v889 = vmul.f32 %v594, %v877
    %v890 = vmul.f32 %v597, %v877
    %v891 = vmul.f32 %v600, %v877
    %v892 = vmul.f32 %v603, %v877
    %v893 = vmul.f32 %v606, %v877
    %v894 = vmul.f32 %v609, %v877
    %v895 = vmul.f32 %v612, %v877
    %v896 = vmul.f32 %v615, %v877
    %v897 = vmul.f32 %v618, %v877
    %v898 = vmul.f32 %v621, %v877
    %v899 = vmul.f32 %v624, %v877
    %v900 = vmul.f32 %v627, %v877
    %v901 = vmax.f32 %v879, 1e-16
    %v902 = vmax.f32 %v880, 1e-16
    %v903 = vmax.f32 %v881, 1e-16
    %v904 = vmax.f32 %v882, 1e-16
    %v905 = vmax.f32 %v883, 1e-16
    %v906 = vmax.f32 %v884, 1e-16
    %v907 = vmax.f32 %v885, 1e-16
    %v908 = vmax.f32 %v886, 1e-16
    %v909 = vmax.f32 %v887, 1e-16
    %v910 = vmax.f32 %v888, 1e-16
    %v911 = vmax.f32 %v889, 1e-16
    %v912 = vmax.f32 %v890, 1e-16
    %v913 = vmax.f32 %v891, 1e-16
    %v914 = vmax.f32 %v892, 1e-16
    %v915 = vmax.f32 %v893, 1e-16
    %v916 = vmax.f32 %v894, 1e-16
    %v917 = vmax.f32 %v895, 1e-16
    %v918 = vmax.f32 %v896, 1e-16
    %v919 = vmax.f32 %v897, 1e-16
    %v920 = vmax.f32 %v898, 1e-16
    %v921 = vmax.f32 %v899, 1e-16
    %v922 = vmax.f32 %v900, 1e-16
    %v923 = vrsqrt.pop %v901
    %v924 = vrsqrt.pop %v902
    %v925 = vrsqrt.pop %v903
    %v926 = vrsqrt.pop %v904
    %v927 = vrsqrt.pop %v905
    %v928 = vrsqrt.pop %v906
    %v929 = vrsqrt.pop %v907
    %v930 = vrsqrt.pop %v908
    %v931 = vrsqrt.pop %v909
    %v932 = vrsqrt.pop %v910
    %v933 = vrsqrt.pop %v911
    %v934 = vrsqrt.pop %v912
    %v935 = vrsqrt.pop %v913
    %v936 = vrsqrt.pop %v914
    %v937 = vrsqrt.pop %v915
    %v938 = vrsqrt.pop %v916
    %v939 = vrsqrt.pop %v917
    %v940 = vrsqrt.pop %v918
    %v941 = vrsqrt.pop %v919
    %v942 = vrsqrt.pop %v920
    %v943 = vrsqrt.pop %v921
    %v944 = vrsqrt.pop %v922
    %v945 = vmul.f32 %v764, %v923
    %v946 = vmul.f32 %v769, %v924
    %v947 = vmul.f32 %v774, %v925
    %v948 = vmul.f32 %v779, %v926
    %v949 = vmul.f32 %v784, %v927
    %v950 = vmul.f32 %v789, %v928
    %v951 = vmul.f32 %v794, %v929
    %v952 = vmul.f32 %v799, %v930
    %v953 = vmul.f32 %v804, %v931
    %v954 = vmul.f32 %v809, %v932
    %v955 = vmul.f32 %v814, %v933
    %v956 = vmul.f32 %v819, %v934
    %v957 = vmul.f32 %v824, %v935
    %v958 = vmul.f32 %v829, %v936
    %v959 = vmul.f32 %v834, %v937
    %v960 = vmul.f32 %v839, %v938
    %v961 = vmul.f32 %v844, %v939
    %v962 = vmul.f32 %v849, %v940
    %v963 = vmul.f32 %v854, %v941
    %v964 = vmul.f32 %v859, %v942
    %v965 = vmul.f32 %v864, %v943
    %v966 = vmul.f32 %v869, %v944
    %v967 = vld [vmem:[#allocation4] sm:$0x1]
    %v969 = vlaneseq
    %v970 = vshrl.u32 %v969, 7
    %v971 = vsub.s32 0, %v970
    %v972 = vrot.slane %v967, %v971
    %vm974 = vcmp.lt.f32.partialorder %v945, %v972
    %vm975 = vcmp.lt.f32.partialorder %v946, %v972
    %vm976 = vcmp.lt.f32.partialorder %v947, %v972
    %vm977 = vcmp.lt.f32.partialorder %v948, %v972
    %vm978 = vcmp.lt.f32.partialorder %v949, %v972
    %vm979 = vcmp.lt.f32.partialorder %v950, %v972
    %vm980 = vcmp.lt.f32.partialorder %v951, %v972
    %vm981 = vcmp.lt.f32.partialorder %v952, %v972
    %vm982 = vcmp.lt.f32.partialorder %v953, %v972
    %vm983 = vcmp.lt.f32.partialorder %v954, %v972
    %vm984 = vcmp.lt.f32.partialorder %v955, %v972
    %vm985 = vcmp.lt.f32.partialorder %v956, %v972
    %vm986 = vcmp.lt.f32.partialorder %v957, %v972
    %vm987 = vcmp.lt.f32.partialorder %v958, %v972
    %vm988 = vcmp.lt.f32.partialorder %v959, %v972
    %vm989 = vcmp.lt.f32.partialorder %v960, %v972
    %vm990 = vcmp.lt.f32.partialorder %v961, %v972
    %vm991 = vcmp.lt.f32.partialorder %v962, %v972
    %vm992 = vcmp.lt.f32.partialorder %v963, %v972
    %vm993 = vcmp.lt.f32.partialorder %v964, %v972
    %vm994 = vcmp.lt.f32.partialorder %v965, %v972
    %vm995 = vcmp.lt.f32.partialorder %v966, %v972
    %v996 = vsub.f32 %v945, %v972
    %v997 = vsub.f32 %v946, %v972
    %v998 = vsub.f32 %v947, %v972
    %v999 = vsub.f32 %v948, %v972
    %v1000 = vsub.f32 %v949, %v972
    %v1001 = vsub.f32 %v950, %v972
    %v1002 = vsub.f32 %v951, %v972
    %v1003 = vsub.f32 %v952, %v972
    %v1004 = vsub.f32 %v953, %v972
    %v1005 = vsub.f32 %v954, %v972
    %v1006 = vsub.f32 %v955, %v972
    %v1007 = vsub.f32 %v956, %v972
    %v1008 = vsub.f32 %v957, %v972
    %v1009 = vsub.f32 %v958, %v972
    %v1010 = vsub.f32 %v959, %v972
    %v1011 = vsub.f32 %v960, %v972
    %v1012 = vsub.f32 %v961, %v972
    %v1013 = vsub.f32 %v962, %v972
    %v1014 = vsub.f32 %v963, %v972
    %v1015 = vsub.f32 %v964, %v972
    %v1016 = vsub.f32 %v965, %v972
    %v1017 = vsub.f32 %v966, %v972
    %v1018 = vsel %vm974, -1e+10, %v996
    %v1019 = vsel %vm975, -1e+10, %v997
    %v1020 = vsel %vm976, -1e+10, %v998
    %v1021 = vsel %vm977, -1e+10, %v999
    %v1022 = vsel %vm978, -1e+10, %v1000
    %v1023 = vsel %vm979, -1e+10, %v1001
    %v1024 = vsel %vm980, -1e+10, %v1002
    %v1025 = vsel %vm981, -1e+10, %v1003
    %v1026 = vsel %vm982, -1e+10, %v1004
    %v1027 = vsel %vm983, -1e+10, %v1005
    %v1028 = vsel %vm984, -1e+10, %v1006
    %v1029 = vsel %vm985, -1e+10, %v1007
    %v1030 = vsel %vm986, -1e+10, %v1008
    %v1031 = vsel %vm987, -1e+10, %v1009
    %v1032 = vsel %vm988, -1e+10, %v1010
    %v1033 = vsel %vm989, -1e+10, %v1011
    %v1034 = vsel %vm990, -1e+10, %v1012
    %v1035 = vsel %vm991, -1e+10, %v1013
    %v1036 = vsel %vm992, -1e+10, %v1014
    %v1037 = vsel %vm993, -1e+10, %v1015
    %v1038 = vsel %vm994, -1e+10, %v1016
    %v1039 = vsel %vm995, -1e+10, %v1017
    %vm1040 = vcmask 39936
    %v1041 = vsel %vm1040, %v1018, -inf
    %1042 = vmax.xlane.f32.xlu0 %v1041
    %v1043 = vpop.xlane.xlu0 %1042
    %v1044 = vsel %vm1040, %v1019, -inf
    %1045 = vmax.xlane.f32.xlu0 %v1044
    %v1046 = vpop.xlane.xlu0 %1045
    %v1047 = vsel %vm1040, %v1020, -inf
    %1048 = vmax.xlane.f32.xlu0 %v1047
    %v1049 = vpop.xlane.xlu0 %1048
    %v1050 = vsel %vm1040, %v1021, -inf
    %1051 = vmax.xlane.f32.xlu0 %v1050
    %v1052 = vpop.xlane.xlu0 %1051
    %v1053 = vsel %vm1040, %v1022, -inf
    %1054 = vmax.xlane.f32.xlu0 %v1053
    %v1055 = vpop.xlane.xlu0 %1054
    %v1056 = vsel %vm1040, %v1023, -inf
    %1057 = vmax.xlane.f32.xlu0 %v1056
    %v1058 = vpop.xlane.xlu0 %1057
    %v1059 = vsel %vm1040, %v1024, -inf
    %1060 = vmax.xlane.f32.xlu0 %v1059
    %v1061 = vpop.xlane.xlu0 %1060
    %v1062 = vsel %vm1040, %v1025, -inf
    %1063 = vmax.xlane.f32.xlu0 %v1062
    %v1064 = vpop.xlane.xlu0 %1063
    %v1065 = vsel %vm1040, %v1026, -inf
    %1066 = vmax.xlane.f32.xlu0 %v1065
    %v1067 = vpop.xlane.xlu0 %1066
    %v1068 = vsel %vm1040, %v1027, -inf
    %1069 = vmax.xlane.f32.xlu0 %v1068
    %v1070 = vpop.xlane.xlu0 %1069
    %v1071 = vsel %vm1040, %v1028, -inf
    %1072 = vmax.xlane.f32.xlu0 %v1071
    %v1073 = vpop.xlane.xlu0 %1072
    %v1074 = vsel %vm1040, %v1029, -inf
    %1075 = vmax.xlane.f32.xlu0 %v1074
    %v1076 = vpop.xlane.xlu0 %1075
    %v1077 = vsel %vm1040, %v1030, -inf
    %1078 = vmax.xlane.f32.xlu0 %v1077
    %v1079 = vpop.xlane.xlu0 %1078
    %v1080 = vsel %vm1040, %v1031, -inf
    %1081 = vmax.xlane.f32.xlu0 %v1080
    %v1082 = vpop.xlane.xlu0 %1081
    %v1083 = vsel %vm1040, %v1032, -inf
    %1084 = vmax.xlane.f32.xlu0 %v1083
    %v1085 = vpop.xlane.xlu0 %1084
    %v1086 = vsel %vm1040, %v1033, -inf
    %1087 = vmax.xlane.f32.xlu0 %v1086
    %v1088 = vpop.xlane.xlu0 %1087
    %v1089 = vsel %vm1040, %v1034, -inf
    %1090 = vmax.xlane.f32.xlu0 %v1089
    %v1091 = vpop.xlane.xlu0 %1090
    %v1092 = vsel %vm1040, %v1035, -inf
    %1093 = vmax.xlane.f32.xlu0 %v1092
    %v1094 = vpop.xlane.xlu0 %1093
    %v1095 = vsel %vm1040, %v1036, -inf
    %1096 = vmax.xlane.f32.xlu0 %v1095
    %v1097 = vpop.xlane.xlu0 %1096
    %v1098 = vsel %vm1040, %v1037, -inf
    %1099 = vmax.xlane.f32.xlu0 %v1098
    %v1100 = vpop.xlane.xlu0 %1099
    %v1101 = vsel %vm1040, %v1038, -inf
    %1102 = vmax.xlane.f32.xlu0 %v1101
    %v1103 = vpop.xlane.xlu0 %1102
    %v1104 = vsel %vm1040, %v1039, -inf
    %1105 = vmax.xlane.f32.xlu0 %v1104
    %v1106 = vpop.xlane.xlu0 %1105
    %v1107 = vsub.f32 %v1018, %v1043
    %v1108 = vsub.f32 %v1019, %v1046
    %v1109 = vsub.f32 %v1020, %v1049
    %v1110 = vsub.f32 %v1021, %v1052
    %v1111 = vsub.f32 %v1022, %v1055
    %v1112 = vsub.f32 %v1023, %v1058
    %v1113 = vsub.f32 %v1024, %v1061
    %v1114 = vsub.f32 %v1025, %v1064
    %v1115 = vsub.f32 %v1026, %v1067
    %v1116 = vsub.f32 %v1027, %v1070
    %v1117 = vsub.f32 %v1028, %v1073
    %v1118 = vsub.f32 %v1029, %v1076
    %v1119 = vsub.f32 %v1030, %v1079
    %v1120 = vsub.f32 %v1031, %v1082
    %v1121 = vsub.f32 %v1032, %v1085
    %v1122 = vsub.f32 %v1033, %v1088
    %v1123 = vsub.f32 %v1034, %v1091
    %v1124 = vsub.f32 %v1035, %v1094
    %v1125 = vsub.f32 %v1036, %v1097
    %v1126 = vsub.f32 %v1037, %v1100
    %v1127 = vsub.f32 %v1038, %v1103
    %v1128 = vsub.f32 %v1039, %v1106
    %v1129 = vmul.f32 %v1107, 1.442695
    %v1130 = vpow.pop %v1129
    %v1131 = vmul.f32 %v1108, 1.442695
    %v1132 = vpow.pop %v1131
    %v1133 = vmul.f32 %v1109, 1.442695
    %v1134 = vpow.pop %v1133
    %v1135 = vmul.f32 %v1110, 1.442695
    %v1136 = vpow.pop %v1135
    %v1137 = vmul.f32 %v1111, 1.442695
    %v1138 = vpow.pop %v1137
    %v1139 = vmul.f32 %v1112, 1.442695
    %v1140 = vpow.pop %v1139
    %v1141 = vmul.f32 %v1113, 1.442695
    %v1142 = vpow.pop %v1141
    %v1143 = vmul.f32 %v1114, 1.442695
    %v1144 = vpow.pop %v1143
    %v1145 = vmul.f32 %v1115, 1.442695
    %v1146 = vpow.pop %v1145
    %v1147 = vmul.f32 %v1116, 1.442695
    %v1148 = vpow.pop %v1147
    %v1149 = vmul.f32 %v1117, 1.442695
    %v1150 = vpow.pop %v1149
    %v1151 = vmul.f32 %v1118, 1.442695
    %v1152 = vpow.pop %v1151
    %v1153 = vmul.f32 %v1119, 1.442695
    %v1154 = vpow.pop %v1153
    %v1155 = vmul.f32 %v1120, 1.442695
    %v1156 = vpow.pop %v1155
    %v1157 = vmul.f32 %v1121, 1.442695
    %v1158 = vpow.pop %v1157
    %v1159 = vmul.f32 %v1122, 1.442695
    %v1160 = vpow.pop %v1159
    %v1161 = vmul.f32 %v1123, 1.442695
    %v1162 = vpow.pop %v1161
    %v1163 = vmul.f32 %v1124, 1.442695
    %v1164 = vpow.pop %v1163
    %v1165 = vmul.f32 %v1125, 1.442695
    %v1166 = vpow.pop %v1165
    %v1167 = vmul.f32 %v1126, 1.442695
    %v1168 = vpow.pop %v1167
    %v1169 = vmul.f32 %v1127, 1.442695
    %v1170 = vpow.pop %v1169
    %v1171 = vmul.f32 %v1128, 1.442695
    %v1172 = vpow.pop %v1171
    %v1173 = vsel %vm1040, %v1130, 0.0
    %1174 = vadd.xlane.f32.xlu0 %v1173
    %v1175 = vpop.xlane.xlu0 %1174
    %v1176 = vsel %vm1040, %v1132, 0.0
    %1177 = vadd.xlane.f32.xlu0 %v1176
    %v1178 = vpop.xlane.xlu0 %1177
    %v1179 = vsel %vm1040, %v1134, 0.0
    %1180 = vadd.xlane.f32.xlu0 %v1179
    %v1181 = vpop.xlane.xlu0 %1180
    %v1182 = vsel %vm1040, %v1136, 0.0
    %1183 = vadd.xlane.f32.xlu0 %v1182
    %v1184 = vpop.xlane.xlu0 %1183
    %v1185 = vsel %vm1040, %v1138, 0.0
    %1186 = vadd.xlane.f32.xlu0 %v1185
    %v1187 = vpop.xlane.xlu0 %1186
    %v1188 = vsel %vm1040, %v1140, 0.0
    %1189 = vadd.xlane.f32.xlu0 %v1188
    %v1190 = vpop.xlane.xlu0 %1189
    %v1191 = vsel %vm1040, %v1142, 0.0
    %1192 = vadd.xlane.f32.xlu0 %v1191
    %v1193 = vpop.xlane.xlu0 %1192
    %v1194 = vsel %vm1040, %v1144, 0.0
    %1195 = vadd.xlane.f32.xlu0 %v1194
    %v1196 = vpop.xlane.xlu0 %1195
    %v1197 = vsel %vm1040, %v1146, 0.0
    %1198 = vadd.xlane.f32.xlu0 %v1197
    %v1199 = vpop.xlane.xlu0 %1198
    %v1200 = vsel %vm1040, %v1148, 0.0
    %1201 = vadd.xlane.f32.xlu0 %v1200
    %v1202 = vpop.xlane.xlu0 %1201
    %v1203 = vsel %vm1040, %v1150, 0.0
    %1204 = vadd.xlane.f32.xlu0 %v1203
    %v1205 = vpop.xlane.xlu0 %1204
    %v1206 = vsel %vm1040, %v1152, 0.0
    %1207 = vadd.xlane.f32.xlu0 %v1206
    %v1208 = vpop.xlane.xlu0 %1207
    %v1209 = vsel %vm1040, %v1154, 0.0
    %1210 = vadd.xlane.f32.xlu0 %v1209
    %v1211 = vpop.xlane.xlu0 %1210
    %v1212 = vsel %vm1040, %v1156, 0.0
    %1213 = vadd.xlane.f32.xlu0 %v1212
    %v1214 = vpop.xlane.xlu0 %1213
    %v1215 = vsel %vm1040, %v1158, 0.0
    %1216 = vadd.xlane.f32.xlu0 %v1215
    %v1217 = vpop.xlane.xlu0 %1216
    %v1218 = vsel %vm1040, %v1160, 0.0
    %1219 = vadd.xlane.f32.xlu0 %v1218
    %v1220 = vpop.xlane.xlu0 %1219
    %v1221 = vsel %vm1040, %v1162, 0.0
    %1222 = vadd.xlane.f32.xlu0 %v1221
    %v1223 = vpop.xlane.xlu0 %1222
    %v1224 = vsel %vm1040, %v1164, 0.0
    %1225 = vadd.xlane.f32.xlu0 %v1224
    %v1226 = vpop.xlane.xlu0 %1225
    %v1227 = vsel %vm1040, %v1166, 0.0
    %1228 = vadd.xlane.f32.xlu0 %v1227
    %v1229 = vpop.xlane.xlu0 %1228
    %v1230 = vsel %vm1040, %v1168, 0.0
    %1231 = vadd.xlane.f32.xlu0 %v1230
    %v1232 = vpop.xlane.xlu0 %1231
    %v1233 = vsel %vm1040, %v1170, 0.0
    %1234 = vadd.xlane.f32.xlu0 %v1233
    %v1235 = vpop.xlane.xlu0 %1234
    %v1236 = vsel %vm1040, %v1172, 0.0
    %1237 = vadd.xlane.f32.xlu0 %v1236
    %v1238 = vpop.xlane.xlu0 %1237
    %v1239 = vrcp.pop %v1175
    %v1240 = vmul.f32 %v1130, %v1239
    %v1241 = vrcp.pop %v1178
    %v1242 = vmul.f32 %v1132, %v1241
    %v1243 = vrcp.pop %v1181
    %v1244 = vmul.f32 %v1134, %v1243
    %v1245 = vrcp.pop %v1184
    %v1246 = vmul.f32 %v1136, %v1245
    %v1247 = vrcp.pop %v1187
    %v1248 = vmul.f32 %v1138, %v1247
    %v1249 = vrcp.pop %v1190
    %v1250 = vmul.f32 %v1140, %v1249
    %v1251 = vrcp.pop %v1193
    %v1252 = vmul.f32 %v1142, %v1251
    %v1253 = vrcp.pop %v1196
    %v1254 = vmul.f32 %v1144, %v1253
    %v1255 = vrcp.pop %v1199
    %v1256 = vmul.f32 %v1146, %v1255
    %v1257 = vrcp.pop %v1202
    %v1258 = vmul.f32 %v1148, %v1257
    %v1259 = vrcp.pop %v1205
    %v1260 = vmul.f32 %v1150, %v1259
    %v1261 = vrcp.pop %v1208
    %v1262 = vmul.f32 %v1152, %v1261
    %v1263 = vrcp.pop %v1211
    %v1264 = vmul.f32 %v1154, %v1263
    %v1265 = vrcp.pop %v1214
    %v1266 = vmul.f32 %v1156, %v1265
    %v1267 = vrcp.pop %v1217
    %v1268 = vmul.f32 %v1158, %v1267
    %v1269 = vrcp.pop %v1220
    %v1270 = vmul.f32 %v1160, %v1269
    %v1271 = vrcp.pop %v1223
    %v1272 = vmul.f32 %v1162, %v1271
    %v1273 = vrcp.pop %v1226
    %v1274 = vmul.f32 %v1164, %v1273
    %v1275 = vrcp.pop %v1229
    %v1276 = vmul.f32 %v1166, %v1275
    %v1277 = vrcp.pop %v1232
    %v1278 = vmul.f32 %v1168, %v1277
    %v1279 = vrcp.pop %v1235
    %v1280 = vmul.f32 %v1170, %v1279
    %v1281 = vrcp.pop %v1238
    %v1282 = vmul.f32 %v1172, %v1281
    %v1283 = vsel %vm974, 1.0, 0.0
    %v1284 = vsel %vm975, 1.0, 0.0
    %v1285 = vsel %vm976, 1.0, 0.0
    %v1286 = vsel %vm977, 1.0, 0.0
    %v1287 = vsel %vm978, 1.0, 0.0
    %v1288 = vsel %vm979, 1.0, 0.0
    %v1289 = vsel %vm980, 1.0, 0.0
    %v1290 = vsel %vm981, 1.0, 0.0
    %v1291 = vsel %vm982, 1.0, 0.0
    %v1292 = vsel %vm983, 1.0, 0.0
    %v1293 = vsel %vm984, 1.0, 0.0
    %v1294 = vsel %vm985, 1.0, 0.0
    %v1295 = vsel %vm986, 1.0, 0.0
    %v1296 = vsel %vm987, 1.0, 0.0
    %v1297 = vsel %vm988, 1.0, 0.0
    %v1298 = vsel %vm989, 1.0, 0.0
    %v1299 = vsel %vm990, 1.0, 0.0
    %v1300 = vsel %vm991, 1.0, 0.0
    %v1301 = vsel %vm992, 1.0, 0.0
    %v1302 = vsel %vm993, 1.0, 0.0
    %v1303 = vsel %vm994, 1.0, 0.0
    %v1304 = vsel %vm995, 1.0, 0.0
    %v1305 = vsel %vm1040, %v1283, inf
    %1306 = vmin.xlane.f32.xlu0 %v1305
    %v1307 = vpop.xlane.xlu0 %1306
    %v1308 = vsel %vm1040, %v1284, inf
    %1309 = vmin.xlane.f32.xlu0 %v1308
    %v1310 = vpop.xlane.xlu0 %1309
    %v1311 = vsel %vm1040, %v1285, inf
    %1312 = vmin.xlane.f32.xlu0 %v1311
    %v1313 = vpop.xlane.xlu0 %1312
    %v1314 = vsel %vm1040, %v1286, inf
    %1315 = vmin.xlane.f32.xlu0 %v1314
    %v1316 = vpop.xlane.xlu0 %1315
    %v1317 = vsel %vm1040, %v1287, inf
    %1318 = vmin.xlane.f32.xlu0 %v1317
    %v1319 = vpop.xlane.xlu0 %1318
    %v1320 = vsel %vm1040, %v1288, inf
    %1321 = vmin.xlane.f32.xlu0 %v1320
    %v1322 = vpop.xlane.xlu0 %1321
    %v1323 = vsel %vm1040, %v1289, inf
    %1324 = vmin.xlane.f32.xlu0 %v1323
    %v1325 = vpop.xlane.xlu0 %1324
    %v1326 = vsel %vm1040, %v1290, inf
    %1327 = vmin.xlane.f32.xlu0 %v1326
    %v1328 = vpop.xlane.xlu0 %1327
    %v1329 = vsel %vm1040, %v1291, inf
    %1330 = vmin.xlane.f32.xlu0 %v1329
    %v1331 = vpop.xlane.xlu0 %1330
    %v1332 = vsel %vm1040, %v1292, inf
    %1333 = vmin.xlane.f32.xlu0 %v1332
    %v1334 = vpop.xlane.xlu0 %1333
    %v1335 = vsel %vm1040, %v1293, inf
    %1336 = vmin.xlane.f32.xlu0 %v1335
    %v1337 = vpop.xlane.xlu0 %1336
    %v1338 = vsel %vm1040, %v1294, inf
    %1339 = vmin.xlane.f32.xlu0 %v1338
    %v1340 = vpop.xlane.xlu0 %1339
    %v1341 = vsel %vm1040, %v1295, inf
    %1342 = vmin.xlane.f32.xlu0 %v1341
    %v1343 = vpop.xlane.xlu0 %1342
    %v1344 = vsel %vm1040, %v1296, inf
    %1345 = vmin.xlane.f32.xlu0 %v1344
    %v1346 = vpop.xlane.xlu0 %1345
    %v1347 = vsel %vm1040, %v1297, inf
    %1348 = vmin.xlane.f32.xlu0 %v1347
    %v1349 = vpop.xlane.xlu0 %1348
    %v1350 = vsel %vm1040, %v1298, inf
    %1351 = vmin.xlane.f32.xlu0 %v1350
    %v1352 = vpop.xlane.xlu0 %1351
    %v1353 = vsel %vm1040, %v1299, inf
    %1354 = vmin.xlane.f32.xlu0 %v1353
    %v1355 = vpop.xlane.xlu0 %1354
    %v1356 = vsel %vm1040, %v1300, inf
    %1357 = vmin.xlane.f32.xlu0 %v1356
    %v1358 = vpop.xlane.xlu0 %1357
    %v1359 = vsel %vm1040, %v1301, inf
    %1360 = vmin.xlane.f32.xlu0 %v1359
    %v1361 = vpop.xlane.xlu0 %1360
    %v1362 = vsel %vm1040, %v1302, inf
    %1363 = vmin.xlane.f32.xlu0 %v1362
    %v1364 = vpop.xlane.xlu0 %1363
    %v1365 = vsel %vm1040, %v1303, inf
    %1366 = vmin.xlane.f32.xlu0 %v1365
    %v1367 = vpop.xlane.xlu0 %1366
    %v1368 = vsel %vm1040, %v1304, inf
    %1369 = vmin.xlane.f32.xlu0 %v1368
    %v1370 = vpop.xlane.xlu0 %1369
    %vm1371 = vcmp.gt.f32.partialorder %v1307, 0.0
    %vm1372 = vcmp.gt.f32.partialorder %v1310, 0.0
    %vm1373 = vcmp.gt.f32.partialorder %v1313, 0.0
    %vm1374 = vcmp.gt.f32.partialorder %v1316, 0.0
    %vm1375 = vcmp.gt.f32.partialorder %v1319, 0.0
    %vm1376 = vcmp.gt.f32.partialorder %v1322, 0.0
    %vm1377 = vcmp.gt.f32.partialorder %v1325, 0.0
    %vm1378 = vcmp.gt.f32.partialorder %v1328, 0.0
    %vm1379 = vcmp.gt.f32.partialorder %v1331, 0.0
    %vm1380 = vcmp.gt.f32.partialorder %v1334, 0.0
    %vm1381 = vcmp.gt.f32.partialorder %v1337, 0.0
    %vm1382 = vcmp.gt.f32.partialorder %v1340, 0.0
    %vm1383 = vcmp.gt.f32.partialorder %v1343, 0.0
    %vm1384 = vcmp.gt.f32.partialorder %v1346, 0.0
    %vm1385 = vcmp.gt.f32.partialorder %v1349, 0.0
    %vm1386 = vcmp.gt.f32.partialorder %v1352, 0.0
    %vm1387 = vcmp.gt.f32.partialorder %v1355, 0.0
    %vm1388 = vcmp.gt.f32.partialorder %v1358, 0.0
    %vm1389 = vcmp.gt.f32.partialorder %v1361, 0.0
    %vm1390 = vcmp.gt.f32.partialorder %v1364, 0.0
    %vm1391 = vcmp.gt.f32.partialorder %v1367, 0.0
    %vm1392 = vcmp.gt.f32.partialorder %v1370, 0.0
    %vm1393 = vmxor %vm428, 1
    %vm1394 = vmxor %vm429, 1
    %vm1395 = vmxor %vm430, 1
    %vm1396 = vmxor %vm431, 1
    %vm1397 = vmxor %vm432, 1
    %vm1398 = vmxor %vm433, 1
    %vm1399 = vmxor %vm434, 1
    %vm1400 = vmxor %vm435, 1
    %vm1401 = vmxor %vm436, 1
    %vm1402 = vmxor %vm437, 1
    %vm1403 = vmxor %vm438, 1
    %vm1404 = vmxor %vm439, 1
    %vm1405 = vmxor %vm440, 1
    %vm1406 = vmxor %vm441, 1
    %vm1407 = vmxor %vm442, 1
    %vm1408 = vmxor %vm443, 1
    %vm1409 = vmxor %vm444, 1
    %vm1410 = vmxor %vm445, 1
    %vm1411 = vmxor %vm446, 1
    %vm1412 = vmxor %vm447, 1
    %vm1413 = vmxor %vm448, 1
    %vm1414 = vmxor %vm449, 1
    %vm1415 = vmor %vm1371, %vm1393
    %vm1416 = vmor %vm1372, %vm1394
    %vm1417 = vmor %vm1373, %vm1395
    %vm1418 = vmor %vm1374, %vm1396
    %vm1419 = vmor %vm1375, %vm1397
    %vm1420 = vmor %vm1376, %vm1398
    %vm1421 = vmor %vm1377, %vm1399
    %vm1422 = vmor %vm1378, %vm1400
    %vm1423 = vmor %vm1379, %vm1401
    %vm1424 = vmor %vm1380, %vm1402
    %vm1425 = vmor %vm1381, %vm1403
    %vm1426 = vmor %vm1382, %vm1404
    %vm1427 = vmor %vm1383, %vm1405
    %vm1428 = vmor %vm1384, %vm1406
    %vm1429 = vmor %vm1385, %vm1407
    %vm1430 = vmor %vm1386, %vm1408
    %vm1431 = vmor %vm1387, %vm1409
    %vm1432 = vmor %vm1388, %vm1410
    %vm1433 = vmor %vm1389, %vm1411
    %vm1434 = vmor %vm1390, %vm1412
    %vm1435 = vmor %vm1391, %vm1413
    %vm1436 = vmor %vm1392, %vm1414
    %v1437 = vsel %vm1415, 1, 0
    %v1438 = vsel %vm1416, 1, 0
    %v1439 = vsel %vm1417, 1, 0
    %v1440 = vsel %vm1418, 1, 0
    %v1441 = vsel %vm1419, 1, 0
    %v1442 = vsel %vm1420, 1, 0
    %v1443 = vsel %vm1421, 1, 0
    %v1444 = vsel %vm1422, 1, 0
    %v1445 = vsel %vm1423, 1, 0
    %v1446 = vsel %vm1424, 1, 0
    %v1447 = vsel %vm1425, 1, 0
    %v1448 = vsel %vm1426, 1, 0
    %v1449 = vsel %vm1427, 1, 0
    %v1450 = vsel %vm1428, 1, 0
    %v1451 = vsel %vm1429, 1, 0
    %v1452 = vsel %vm1430, 1, 0
    %v1453 = vsel %vm1431, 1, 0
    %v1454 = vsel %vm1432, 1, 0
    %v1455 = vsel %vm1433, 1, 0
    %v1456 = vsel %vm1434, 1, 0
    %v1457 = vsel %vm1435, 1, 0
    %v1458 = vsel %vm1436, 1, 0
    %vm1459 = vcmp.eq.s32.totalorder %v1437, 1
    %vm1460 = vcmp.eq.s32.totalorder %v1438, 1
    %vm1461 = vcmp.eq.s32.totalorder %v1439, 1
    %vm1462 = vcmp.eq.s32.totalorder %v1440, 1
    %vm1463 = vcmp.eq.s32.totalorder %v1441, 1
    %vm1464 = vcmp.eq.s32.totalorder %v1442, 1
    %vm1465 = vcmp.eq.s32.totalorder %v1443, 1
    %vm1466 = vcmp.eq.s32.totalorder %v1444, 1
    %vm1467 = vcmp.eq.s32.totalorder %v1445, 1
    %vm1468 = vcmp.eq.s32.totalorder %v1446, 1
    %vm1469 = vcmp.eq.s32.totalorder %v1447, 1
    %vm1470 = vcmp.eq.s32.totalorder %v1448, 1
    %vm1471 = vcmp.eq.s32.totalorder %v1449, 1
    %vm1472 = vcmp.eq.s32.totalorder %v1450, 1
    %vm1473 = vcmp.eq.s32.totalorder %v1451, 1
    %vm1474 = vcmp.eq.s32.totalorder %v1452, 1
    %vm1475 = vcmp.eq.s32.totalorder %v1453, 1
    %vm1476 = vcmp.eq.s32.totalorder %v1454, 1
    %vm1477 = vcmp.eq.s32.totalorder %v1455, 1
    %vm1478 = vcmp.eq.s32.totalorder %v1456, 1
    %vm1479 = vcmp.eq.s32.totalorder %v1457, 1
    %vm1480 = vcmp.eq.s32.totalorder %v1458, 1
    %v1481 = vsel %vm1459, 0.0, %v1240
    %v1482 = vsel %vm1460, 0.0, %v1242
    %v1483 = vsel %vm1461, 0.0, %v1244
    %v1484 = vsel %vm1462, 0.0, %v1246
    %v1485 = vsel %vm1463, 0.0, %v1248
    %v1486 = vsel %vm1464, 0.0, %v1250
    %v1487 = vsel %vm1465, 0.0, %v1252
    %v1488 = vsel %vm1466, 0.0, %v1254
    %v1489 = vsel %vm1467, 0.0, %v1256
    %v1490 = vsel %vm1468, 0.0, %v1258
    %v1491 = vsel %vm1469, 0.0, %v1260
    %v1492 = vsel %vm1470, 0.0, %v1262
    %v1493 = vsel %vm1471, 0.0, %v1264
    %v1494 = vsel %vm1472, 0.0, %v1266
    %v1495 = vsel %vm1473, 0.0, %v1268
    %v1496 = vsel %vm1474, 0.0, %v1270
    %v1497 = vsel %vm1475, 0.0, %v1272
    %v1498 = vsel %vm1476, 0.0, %v1274
    %v1499 = vsel %vm1477, 0.0, %v1276
    %v1500 = vsel %vm1478, 0.0, %v1278
    %v1501 = vsel %vm1479, 0.0, %v1280
    %v1502 = vsel %vm1480, 0.0, %v1282
    %v1503 = vld [vmem:[#allocation6] sm:$0x1f]
    %1504 = vxpose.xlu0.b32.start [1/16] %v1481, 128
    %1505 = vxpose.xlu0.b32.cont [2/16] %v1482, 128
    %1506 = vxpose.xlu0.b32.cont [3/16] %v1483, 128
    %1507 = vxpose.xlu0.b32.cont [4/16] %v1484, 128
    %1508 = vxpose.xlu0.b32.cont [5/16] %v1485, 128
    %1509 = vxpose.xlu0.b32.cont [6/16] %v1486, 128
    %1510 = vxpose.xlu0.b32.cont [7/16] %v1487, 128
    %1511 = vxpose.xlu0.b32.cont [8/16] %v1488, 128
    %1512 = vxpose.xlu0.b32.cont [9/16] %v1489, 128
    %1513 = vxpose.xlu0.b32.cont [10/16] %v1490, 128
    %1514 = vxpose.xlu0.b32.cont [11/16] %v1491, 128
    %1515 = vxpose.xlu0.b32.cont [12/16] %v1492, 128
    %1516 = vxpose.xlu0.b32.cont [13/16] %v1493, 128
    %1517 = vxpose.xlu0.b32.cont [14/16] %v1494, 128
    %1518 = vxpose.xlu0.b32.cont [15/16] %v1495, 128
    %1519 = vxpose.xlu0.b32.end [16/16] %v1496, 128
    %v1520 = vpop.trf.xlu0
    %v1521 = vpop.trf.xlu0
    %v1522 = vpop.trf.xlu0
    %v1523 = vpop.trf.xlu0
    %v1524 = vpop.trf.xlu0
    %v1525 = vpop.trf.xlu0
    %v1526 = vpop.trf.xlu0
    %v1527 = vpop.trf.xlu0
    %v1528 = vpop.trf.xlu0
    %v1529 = vpop.trf.xlu0
    %v1530 = vpop.trf.xlu0
    %v1531 = vpop.trf.xlu0
    %v1532 = vpop.trf.xlu0
    %v1533 = vpop.trf.xlu0
    %v1534 = vpop.trf.xlu0
    %v1535 = vpop.trf.xlu0
    %1536 = vxpose.xlu0.b32.start [1/16] %v1497, 128
    %1537 = vxpose.xlu0.b32.cont [2/16] %v1498, 128
    %1538 = vxpose.xlu0.b32.cont [3/16] %v1499, 128
    %1539 = vxpose.xlu0.b32.cont [4/16] %v1500, 128
    %1540 = vxpose.xlu0.b32.cont [5/16] %v1501, 128
    %1541 = vxpose.xlu0.b32.cont [6/16] %v1502, 128
    %1542 = vxpose.xlu0.b32.cont [7/16] 0.0, 128
    %1543 = vxpose.xlu0.b32.cont [8/16] 0.0, 128
    %1544 = vxpose.xlu0.b32.cont [9/16] 0.0, 128
    %1545 = vxpose.xlu0.b32.cont [10/16] 0.0, 128
    %1546 = vxpose.xlu0.b32.cont [11/16] 0.0, 128
    %1547 = vxpose.xlu0.b32.cont [12/16] 0.0, 128
    %1548 = vxpose.xlu0.b32.cont [13/16] 0.0, 128
    %1549 = vxpose.xlu0.b32.cont [14/16] 0.0, 128
    %1550 = vxpose.xlu0.b32.cont [15/16] 0.0, 128
    %1551 = vxpose.xlu0.b32.end [16/16] 0.0, 128
    %v1552 = vpop.trf.xlu0
    %v1553 = vpop.trf.xlu0
    %v1554 = vpop.trf.xlu0
    %v1555 = vpop.trf.xlu0
    %v1556 = vpop.trf.xlu0
    %v1557 = vpop.trf.xlu0
    %v1558 = vpop.trf.xlu0
    %v1559 = vpop.trf.xlu0
    %v1560 = vpop.trf.xlu0
    %v1561 = vpop.trf.xlu0
    %v1562 = vpop.trf.xlu0
    %v1563 = vpop.trf.xlu0
    %v1564 = vpop.trf.xlu0
    %v1565 = vpop.trf.xlu0
    %v1566 = vpop.trf.xlu0
    %v1567 = vpop.trf.xlu0
    %vm1568 = vcmask 392192
    %v1570 = vsel %vm1568, %v1552, 0
    %1572 = vmatprep.subr.mxu0 0.0
    %1573 = vmatpush1.msra.mxu0 %v516
    %1574 = vmatprep.subr.mxu0 0.0
    %1575 = vmatpush1.msra.mxu0 %v517
    %1576 = vmatprep.subr.mxu0 0.0
    %1577 = vmatpush1.msra.mxu0 %v518
    %1578 = vmatprep.subr.mxu0 0.0
    %1579 = vmatpush1.msra.mxu0 %v519
    %1580 = vmatprep.subr.mxu0 0.0
    %1581 = vmatpush1.msra.mxu0 %v520
    %1582 = vmatprep.subr.mxu0 0.0
    %1583 = vmatpush1.msra.mxu0 %v521
    %1584 = vmatprep.subr.mxu0 0.0
    %1585 = vmatpush1.msra.mxu0 %v522
    %1586 = vmatprep.subr.mxu0 0.0
    %1587 = vmatpush1.msra.mxu0 %v523
    %1588 = vmatprep.subr.mxu0 0.0
    %1589 = vmatpush1.msra.mxu0 %v524
    %1590 = vmatprep.subr.mxu0 0.0
    %1591 = vmatpush1.msra.mxu0 %v525
    %1592 = vmatprep.subr.mxu0 0.0
    %1593 = vmatpush1.msra.mxu0 %v526
    %1594 = vmatprep.subr.mxu0 0.0
    %1595 = vmatpush1.msra.mxu0 %v527
    %1596 = vmatprep.subr.mxu0 0.0
    %1597 = vmatpush1.msra.mxu0 %v528
    %1598 = vmatprep.subr.mxu0 0.0
    %1599 = vmatpush1.msra.mxu0 %v529
    %1600 = vmatprep.subr.mxu0 0.0
    %1601 = vmatpush1.msra.mxu0 %v530
    %1602 = vmatprep.subr.mxu0 0.0
    %1603 = vmatpush1.msra.mxu0 %v531
    %1604 = vmatprep.subr.mxu0 0.0
    %1605 = vmatpush1.msra.mxu0 %v532
    %1606 = vmatprep.subr.mxu0 0.0
    %1607 = vmatpush1.msra.mxu0 %v533
    %1608 = vmatprep.subr.mxu0 0.0
    %1609 = vmatpush1.msra.mxu0 %v534
    %1610 = vmatprep.subr.mxu0 0.0
    %1611 = vmatpush1.msra.mxu0 %v535
    %1612 = vmatprep.subr.mxu0 0.0
    %1613 = vmatpush1.msra.mxu0 %v536
    %1614 = vmatprep.subr.mxu0 0.0
    %1615 = vmatpush1.msra.mxu0 %v537
    %1616 = vmatprep.subr.mxu0 0.0
    %1617 = vmatpush1.msra.mxu0 0.0
    %1618 = vmatprep.subr.mxu0 0.0
    %1619 = vmatpush1.msra.mxu0 0.0
    %1620 = vmatprep.subr.mxu0 0.0
    %1621 = vmatpush1.msra.mxu0 0.0
    %1622 = vmatprep.subr.mxu0 0.0
    %1623 = vmatpush1.msra.mxu0 0.0
    %1624 = vmatprep.subr.mxu0 0.0
    %1625 = vmatpush1.msra.mxu0 0.0
    %1626 = vmatprep.subr.mxu0 0.0
    %1627 = vmatpush1.msra.mxu0 0.0
    %1628 = vmatprep.subr.mxu0 0.0
    %1629 = vmatpush1.msra.mxu0 0.0
    %1630 = vmatprep.subr.mxu0 0.0
    %1631 = vmatpush1.msra.mxu0 0.0
    %1632 = vmatprep.subr.mxu0 0.0
    %1633 = vmatpush1.msra.mxu0 0.0
    %1634 = vmatprep.subr.mxu0 0.0
    %1635 = vmatpush1.msra.mxu0 0.0
    %1636 = vmatprep.mubr.f32.mxu0 %v1570
    %1637 = vmatmul.mubr.f32.gmra.mrb[0].mxu0 %v1520
    %v1638 = vpop.f32.mrb[0].mxu0
    %v1639 = vadd.f32 0.0, %v1638
    %v1640 = vpop.f32.mrb[0].mxu0
    %1641 = vdwg.mxu0
    %v1642 = vadd.f32 %v1503, %v1639
    %vm1643 = vcmask 258048
    %1644 = vst.msk [vmem:[#allocation6] sm:$0x1f] %vm1643, %v1642
    %v1645 = vld [vmem:[#allocation7] sm:$0x1]
    %v1646 = vsel %vm1040, %v1481, 0.0
    %v1647 = vsel %vm1040, %v1482, 0.0
    %v1648 = vadd.f32 %v1646, %v1647
    %v1649 = vsel %vm1040, %v1483, 0.0
    %v1650 = vadd.f32 %v1648, %v1649
    %v1651 = vsel %vm1040, %v1484, 0.0
    %v1652 = vadd.f32 %v1650, %v1651
    %v1653 = vsel %vm1040, %v1485, 0.0
    %v1654 = vadd.f32 %v1652, %v1653
    %v1655 = vsel %vm1040, %v1486, 0.0
    %v1656 = vadd.f32 %v1654, %v1655
    %v1657 = vsel %vm1040, %v1487, 0.0
    %v1658 = vadd.f32 %v1656, %v1657
    %v1659 = vsel %vm1040, %v1488, 0.0
    %v1660 = vadd.f32 %v1658, %v1659
    %v1661 = vsel %vm1040, %v1489, 0.0
    %v1662 = vadd.f32 %v1660, %v1661
    %v1663 = vsel %vm1040, %v1490, 0.0
    %v1664 = vadd.f32 %v1662, %v1663
    %v1665 = vsel %vm1040, %v1491, 0.0
    %v1666 = vadd.f32 %v1664, %v1665
    %v1667 = vsel %vm1040, %v1492, 0.0
    %v1668 = vadd.f32 %v1666, %v1667
    %v1669 = vsel %vm1040, %v1493, 0.0
    %v1670 = vadd.f32 %v1668, %v1669
    %v1671 = vsel %vm1040, %v1494, 0.0
    %v1672 = vadd.f32 %v1670, %v1671
    %v1673 = vsel %vm1040, %v1495, 0.0
    %v1674 = vadd.f32 %v1672, %v1673
    %v1675 = vsel %vm1040, %v1496, 0.0
    %v1676 = vadd.f32 %v1674, %v1675
    %v1677 = vsel %vm1040, %v1497, 0.0
    %v1678 = vadd.f32 %v1676, %v1677
    %v1679 = vsel %vm1040, %v1498, 0.0
    %v1680 = vadd.f32 %v1678, %v1679
    %v1681 = vsel %vm1040, %v1499, 0.0
    %v1682 = vadd.f32 %v1680, %v1681
    %v1683 = vsel %vm1040, %v1500, 0.0
    %v1684 = vadd.f32 %v1682, %v1683
    %v1685 = vsel %vm1040, %v1501, 0.0
    %v1686 = vadd.f32 %v1684, %v1685
    %v1687 = vsel %vm1040, %v1502, 0.0
    %v1688 = vadd.f32 %v1686, %v1687
    %v1689 = vrot.slane %v1688, 4
    %v1690 = vadd.f32 %v1688, %v1689
    %v1691 = vrot.slane %v1690, 2
    %v1692 = vadd.f32 %v1690, %v1691
    %v1693 = vrot.slane %v1692, 1
    %v1694 = vadd.f32 %v1692, %v1693
    %v1695 = vadd.f32 %v1645, %v1694
    %vm1696 = vcmask 32768
    %1697 = vst.msk [vmem:[#allocation7] sm:$0x1] %vm1696, %v1695
    // Predicated region
    $region34: #{tpu_custom_call.1} parent=1 // pred_check
      %p1698 = pneg %p38
    $region35: #{tpu_custom_call.1} parent=1 // pred_check_branch
      %1700 = sbr.rel (%p1698) target = $region37
    $region36: #{tpu_custom_call.1} parent=1 // pred_region
      %s1701 = sld [smem:[#allocation9]]
      %v1702 = vld [vmem:[#allocation7] sm:$0x1]
      %v1703 = vstv %s1701
      %v1704 = vmul.f32 %v1703, %v1702
      %v1705 = vadd.f32 %v1704, 1.0
      %v1706 = vld [vmem:[#allocation3] sm:$0x1f]
      %v1707 = vld [vmem:[#allocation6] sm:$0x1f]
      %v1708 = vmul.f32 %v1703, %v1707
      %v1709 = vadd.f32 %v1706, %v1708
      %1710 = vxpose.xlu0.b32.start [1/16] %v1705, 128
      %1711 = vxpose.xlu0.b32.cont [2/16] 0.0, 128
      %1712 = vxpose.xlu0.b32.cont [3/16] 0.0, 128
      %1713 = vxpose.xlu0.b32.cont [4/16] 0.0, 128
      %1714 = vxpose.xlu0.b32.cont [5/16] 0.0, 128
      %1715 = vxpose.xlu0.b32.cont [6/16] 0.0, 128
      %1716 = vxpose.xlu0.b32.cont [7/16] 0.0, 128
      %1717 = vxpose.xlu0.b32.cont [8/16] 0.0, 128
      %1718 = vxpose.xlu0.b32.cont [9/16] 0.0, 128
      %1719 = vxpose.xlu0.b32.cont [10/16] 0.0, 128
      %1720 = vxpose.xlu0.b32.cont [11/16] 0.0, 128
      %1721 = vxpose.xlu0.b32.cont [12/16] 0.0, 128
      %1722 = vxpose.xlu0.b32.cont [13/16] 0.0, 128
      %1723 = vxpose.xlu0.b32.cont [14/16] 0.0, 128
      %1724 = vxpose.xlu0.b32.cont [15/16] 0.0, 128
      %1725 = vxpose.xlu0.b32.end [16/16] 0.0, 128
      %v1726 = vpop.trf.xlu0
      %v1727 = vpop.trf.xlu0
      %v1728 = vpop.trf.xlu0
      %v1729 = vpop.trf.xlu0
      %v1730 = vpop.trf.xlu0
      %v1731 = vpop.trf.xlu0
      %v1732 = vpop.trf.xlu0
      %v1733 = vpop.trf.xlu0
      %v1734 = vpop.trf.xlu0
      %v1735 = vpop.trf.xlu0
      %v1736 = vpop.trf.xlu0
      %v1737 = vpop.trf.xlu0
      %v1738 = vpop.trf.xlu0
      %v1739 = vpop.trf.xlu0
      %v1740 = vpop.trf.xlu0
      %v1741 = vpop.trf.xlu0
      %1743 = vset.pattern.permute.xlu0 0
      %1744 = vperm.xlu0 %1743, %v1726
      %v1745 = vpop.permute.xlu0 %1744
      %v1747 = vrcp.pop %v1745
      %v1748 = vmul.f32 %v1709, %v1747
      %1749 = vst.msk [vmem:[#allocation12] sm:$0x1f] %vm1643, %v1748
    $region37: #{tpu_custom_call.1} parent=1 // pred_fallthru
      _
    // Predicated region
    $region38: #{tpu_custom_call.1} parent=1 // pred_check
      _
    $region39: #{tpu_custom_call.1} parent=1 // pred_check_branch
      %1751 = sbr.rel (0) target = $region41
    $region40: #{tpu_custom_call.1} parent=1 // pred_region
      %s1753 = ssub.s32 128, 128
      %1754 = vsyncadd [#allocation10], %s1753
      %s1756 = sshll.u32 [#allocation12], 4
      %s1757 = int_to_ptr.vmem [resolvable:$true] %s1756
      %1759 = dma.vmem_to_hbm [thread:$0]  %s1757, 128, %s6, [#allocation10]
    $region41: #{tpu_custom_call.1} parent=1 // pred_fallthru
      _
    // Predicated region
    $region42: #{tpu_custom_call.1} parent=1 // pred_check
      _
    $region43: #{tpu_custom_call.1} parent=1 // pred_check_branch
      %1761 = sbr.rel (0) target = $region45
    $region44: #{tpu_custom_call.1} parent=1 // pred_region
      %1762 = dma.done [#allocation10], 128
    $region45: #{tpu_custom_call.1} parent=1 // pred_fallthru
      _
    %1763 = vsyncpa [#allocation10], 1
    %1764 = vsyncpa [#allocation11], 1

</llo_original>
